<compile_context>
chip_gen: v7x
topology: tpu7x:2x2x1
jax: 0.10.0
libtpu: 0.0.40
codegen_flags: <defaults>
</compile_context>

<pallas_src>
import functools

import jax
import jax.numpy as jnp
from jax.experimental import pallas as pl
from jax.experimental.pallas import tpu as pltpu


# --------------------------- pass 1: GRU recurrence + dynamic graph ---------------------------

def _graph_state_kernel(xm_ref, h0_ref, wih_ref, bih_ref, whh_ref, bhh_ref,
                        wsr_ref, bsr_ref, a_out_ref, states_ref,
                        *, batch, n_nodes, dp):
    w = pl.program_id(0)

    # initial dynamic states (computed in the wrapper, copied once)
    @pl.when(w == 0)
    def _():
        states_ref[...] = h0_ref[...]

    xm = xm_ref[0]                     # (M, C)  window time-mean, f32
    h = states_ref[...]                # (M, Dp) f32, cols D..Dp-1 are zero

    # GRU-cell update; gate blocks are 128-lane aligned (free slices)
    gi = jnp.dot(xm, wih_ref[...], preferred_element_type=jnp.float32) + bih_ref[...]
    gh = jnp.dot(h, whh_ref[...], preferred_element_type=jnp.float32) + bhh_ref[...]
    r = jax.nn.sigmoid(gi[:, :dp] + gh[:, :dp])
    z = jax.nn.sigmoid(gi[:, dp:2 * dp] + gh[:, dp:2 * dp])
    cand = jnp.tanh(gi[:, 2 * dp:] + r * gh[:, 2 * dp:])
    h_new = (1.0 - z) * cand + z * h
    states_ref[...] = h_new

    # send / receive embeddings (fused weight), per-batch (N, N) adjacency
    sr = jnp.tanh(jnp.dot(h_new, wsr_ref[...], preferred_element_type=jnp.float32)
                  + bsr_ref[...])
    s3 = sr[:, :dp].reshape(batch, n_nodes, dp)
    r3 = sr[:, dp:].reshape(batch, n_nodes, dp)
    dn = (((2,), (2,)), ((0,), (0,)))          # contract feature dim, batch over b
    e = jax.lax.dot_general(s3, r3, dn, preferred_element_type=jnp.float32)    # (B,N,N)
    e_t = jax.lax.dot_general(r3, s3, dn, preferred_element_type=jnp.float32)  # transpose
    adj = jax.nn.relu(jnp.tanh(e - e_t))

    # self loops + row normalization (N^2 work only, not (B*N)^2)
    row = jax.lax.broadcasted_iota(jnp.int32, (n_nodes, n_nodes), 0)
    col = jax.lax.broadcasted_iota(jnp.int32, (n_nodes, n_nodes), 1)
    adj = adj + jnp.where(row == col, 1.0, 0.0)[None]
    deg = jnp.sum(adj, axis=-1, keepdims=True)
    a_norm = adj * pl.reciprocal(deg, approx=True)      # deg >= 1 (self loops)
    a_out_ref[0] = a_norm.astype(a_out_ref.dtype)


# --------------------------- pass 2: MixProp (parallel over window x batch) -------------------

def _mixprop_kernel(x_ref, a_ref, wmlp_ref, bmlp_ref, out_ref, *, gdep, alpha):
    xw16 = x_ref[0, 0]                                  # (N, F) bf16
    a16 = a_ref[0, 0]                                   # (N, N) bf16
    xw = xw16.astype(jnp.float32)

    # per-hop accumulation: out = sum_k hop_k @ W_k  (no concat buffer)
    out = jnp.dot(xw16, wmlp_ref[0], preferred_element_type=jnp.float32)
    hk = xw
    for k in range(1, gdep + 1):
        hk = alpha * xw + (1.0 - alpha) * jnp.dot(
            a16, hk.astype(jnp.bfloat16), preferred_element_type=jnp.float32)
        out = out + jnp.dot(hk.astype(jnp.bfloat16), wmlp_ref[k],
                            preferred_element_type=jnp.float32)
    out_ref[0, 0] = (out + bmlp_ref[...]).astype(out_ref.dtype)


# --------------------------------------- wrapper ----------------------------------------------

def evolving_gconv_pallas(x_nchw, st_node_fea, params, *, dy_interval, gcn_depth,
                          propalpha):
    B, C, N, T = x_nchw.shape
    assert T % dy_interval == 0, "demo requires T divisible by dy_interval"
    tau = dy_interval
    n_win = T // tau
    M = B * N
    F = tau * C
    D = params["w_s2d"].shape[0]
    Cres = params["w_mlp"].shape[0]
    G = gcn_depth
    Dp = 128 * pl.cdiv(D, 128)            # gate width padded to 128 lanes
    f32, bf16 = jnp.float32, jnp.bfloat16

    # ---- activation layouts: x_p[w,b,n,t*C+c] = x[b,c,n,w*tau+t]; xm = window time-mean ----
    x5 = (jnp.transpose(x_nchw, (0, 2, 3, 1))
          .reshape(B, N, n_win, tau, C)
          .transpose(2, 0, 1, 3, 4))                                  # (n_win,B,N,tau,C)
    xm = jnp.mean(x5, axis=3).reshape(n_win, M, C).astype(f32)        # GRU inputs (tiny)
    x_p = x5.reshape(n_win, B, N, F).astype(bf16)                     # MixProp stream (bf16)

    # ---- initial dynamic state (linear_s2d hoisted to wrapper), padded to Dp ----
    h0 = st_node_fea @ params["w_s2d"].T + params["b_s2d"]            # (N, D)
    h0 = jnp.broadcast_to(h0[None], (B, N, D)).reshape(M, D)
    h0p = jnp.zeros((M, Dp), f32).at[:, :D].set(h0)

    # ---- GRU / graph-head weights, each gate padded to its own 128-lane block ----
    def pad_gate_cols(w_t, n_gates):                 # (in, n_gates*D) -> (in, n_gates*Dp)
        out = jnp.zeros((w_t.shape[0], n_gates * Dp), f32)
        for g in range(n_gates):
            out = out.at[:, g * Dp:g * Dp + D].set(w_t[:, g * D:(g + 1) * D])
        return out

    def pad_gate_bias(b, n_gates):
        out = jnp.zeros((1, n_gates * Dp), f32)
        for g in range(n_gates):
            out = out.at[0, g * Dp:g * Dp + D].set(b[g * D:(g + 1) * D])
        return out

    wih_p = pad_gate_cols(params["w_ih"].T.astype(f32), 3)            # (C, 3Dp)
    bih_p = pad_gate_bias(params["b_ih"], 3)
    whh_p = jnp.zeros((Dp, 3 * Dp), f32).at[:D].set(
        pad_gate_cols(params["w_hh"].T.astype(f32), 3))               # (Dp, 3Dp)
    bhh_p = pad_gate_bias(params["b_hh"], 3)
    wsr_p = jnp.zeros((Dp, 2 * Dp), f32)
    wsr_p = wsr_p.at[:D, :D].set(params["w_send"].T)
    wsr_p = wsr_p.at[:D, Dp:Dp + D].set(params["w_recv"].T)
    bsr_p = jnp.zeros((1, 2 * Dp), f32)
    bsr_p = bsr_p.at[0, :D].set(params["b_send"])
    bsr_p = bsr_p.at[0, Dp:Dp + D].set(params["b_recv"])

    # ---- per-hop MLP weight blocks (1x1 conv folded, block-diagonal over t) ----
    wfull = params["w_mlp"][:, :, 0, 0]                               # (Cres, (G+1)*C)
    w3 = wfull.reshape(Cres, G + 1, C).transpose(1, 2, 0)             # (G+1, C, Cres)
    eye_t = jnp.eye(tau, dtype=f32)
    wblk = jnp.einsum("kco,ts->ktcso", w3, eye_t).reshape(
        G + 1, F, tau * Cres).astype(bf16)                            # (G+1, F, tau*Cres)
    bblk = jnp.tile(params["b_mlp"], (tau,))[None, :].astype(f32)     # (1, tau*Cres)

    # ---- pass 1: sequential GRU recurrence + per-window, per-batch adjacency ----
    graph_kernel = functools.partial(_graph_state_kernel, batch=B, n_nodes=N, dp=Dp)
    a_norm = pl.pallas_call(
        graph_kernel,
        out_shape=jax.ShapeDtypeStruct((n_win, B, N, N), bf16),
        grid_spec=pltpu.PrefetchScalarGridSpec(
            num_scalar_prefetch=0,
            grid=(n_win,),
            in_specs=[
                pl.BlockSpec((1, M, C), lambda w: (w, 0, 0)),
                pl.BlockSpec((M, Dp), lambda w: (0, 0)),
                pl.BlockSpec((C, 3 * Dp), lambda w: (0, 0)),
                pl.BlockSpec((1, 3 * Dp), lambda w: (0, 0)),
                pl.BlockSpec((Dp, 3 * Dp), lambda w: (0, 0)),
                pl.BlockSpec((1, 3 * Dp), lambda w: (0, 0)),
                pl.BlockSpec((Dp, 2 * Dp), lambda w: (0, 0)),
                pl.BlockSpec((1, 2 * Dp), lambda w: (0, 0)),
            ],
            out_specs=pl.BlockSpec((1, B, N, N), lambda w: (w, 0, 0, 0)),
            scratch_shapes=[pltpu.VMEM((M, Dp), jnp.float32)],        # states_dy carry
        ),
        # window axis is a true recurrence over states_dy -> must stay sequential
        compiler_params=pltpu.CompilerParams(
            dimension_semantics=("arbitrary",),
            vmem_limit_bytes=32 * 1024 * 1024),
    )(xm, h0p, wih_p, bih_p, whh_p, bhh_p, wsr_p, bsr_p)

    # ---- pass 2: MixProp, independent per (window, batch) -> both axes "parallel" ----
    mix_kernel = functools.partial(_mixprop_kernel, gdep=G, alpha=float(propalpha))
    out_p = pl.pallas_call(
        mix_kernel,
        out_shape=jax.ShapeDtypeStruct((n_win, B, N, tau * Cres), x_nchw.dtype),
        grid_spec=pltpu.PrefetchScalarGridSpec(
            num_scalar_prefetch=0,
            grid=(n_win, B),
            in_specs=[
                pl.BlockSpec((1, 1, N, F), lambda w, b: (w, b, 0, 0)),
                pl.BlockSpec((1, 1, N, N), lambda w, b: (w, b, 0, 0)),
                pl.BlockSpec((G + 1, F, tau * Cres), lambda w, b: (0, 0, 0)),
                pl.BlockSpec((1, tau * Cres), lambda w, b: (0, 0)),
            ],
            out_specs=pl.BlockSpec((1, 1, N, tau * Cres), lambda w, b: (w, b, 0, 0)),
        ),
        compiler_params=pltpu.CompilerParams(
            dimension_semantics=("parallel", "parallel"),
            vmem_limit_bytes=32 * 1024 * 1024),
    )(x_p, a_norm, wblk, bblk)

    # (n_win, B, N, tau*Cres) -> NCHW (B, Cres, N, T) like the PyTorch module
    out = (out_p.reshape(n_win, B, N, tau, Cres)
           .transpose(1, 4, 2, 0, 3)
           .reshape(B, Cres, N, T))
    return out


# ---------------- deterministic PyTorch-style parameter construction ----------------

def init_params(key, conv_channels, residual_channels, gcn_depth, st_dim, dy_dim):
    C, Cres, G, S, D = conv_channels, residual_channels, gcn_depth, st_dim, dy_dim
    ks = jax.random.split(key, 12)

    def u(k, shape, fan_in):
        b = 1.0 / float(fan_in) ** 0.5
        return jax.random.uniform(k, shape, jnp.float32, -b, b)

    return {
        "w_s2d": u(ks[0], (D, S), S), "b_s2d": u(ks[1], (D,), S),
        "w_ih": u(ks[2], (3 * D, C), D), "b_ih": u(ks[3], (3 * D,), D),
        "w_hh": u(ks[4], (3 * D, D), D), "b_hh": u(ks[5], (3 * D,), D),
        "w_send": u(ks[6], (D, D), D), "b_send": u(ks[7], (D,), D),
        "w_recv": u(ks[8], (D, D), D), "b_recv": u(ks[9], (D,), D),
        "w_mlp": u(ks[10], (Cres, (G + 1) * C, 1, 1), (G + 1) * C),
        "b_mlp": u(ks[11], (Cres,), (G + 1) * C),
    }


# ---------------- pure-JAX f32 reference of the (assumed) PyTorch forward ----------------

def evolving_gconv_reference(x, st_fea, p, *, dy_interval, gcn_depth, propalpha):
    B, C, N, T = x.shape
    D = p["w_s2d"].shape[0]
    wih, whh, bih, bhh = p["w_ih"], p["w_hh"], p["b_ih"], p["b_hh"]
    wconv = p["w_mlp"][:, :, 0, 0]
    bconv = p["b_mlp"]

    states = st_fea @ p["w_s2d"].T + p["b_s2d"]                 # (N, D)
    states = jnp.broadcast_to(states[None], (B, N, D))
    outs = []
    for i_t in range(0, T, dy_interval):
        x_i = x[..., i_t:i_t + dy_interval]                     # (B, C, N, tau)
        inp = jnp.mean(jnp.swapaxes(x_i, 1, 2), axis=-1)        # (B, N, C)
        xi = inp.reshape(B * N, C)
        hh = states.reshape(B * N, D)
        gi = xi @ wih.T + bih
        gh = hh @ whh.T + bhh
        r = jax.nn.sigmoid(gi[:, :D] + gh[:, :D])
        z = jax.nn.sigmoid(gi[:, D:2 * D] + gh[:, D:2 * D])
        cand = jnp.tanh(gi[:, 2 * D:] + r * gh[:, 2 * D:])
        h = (1.0 - z) * cand + z * hh
        states = h.reshape(B, N, D)
        s_emb = jnp.tanh(states @ p["w_send"].T + p["b_send"])
        r_emb = jnp.tanh(states @ p["w_recv"].T + p["b_recv"])
        e1 = jnp.einsum("bvd,bwd->bvw", s_emb, r_emb)
        adj = jax.nn.relu(jnp.tanh(e1 - jnp.swapaxes(e1, 1, 2)))
        adj = adj + jnp.eye(N)[None]
        a = adj / adj.sum(-1, keepdims=True)
        hcur = x_i
        hops = [hcur]
        for _ in range(gcn_depth):
            hcur = propalpha * x_i + (1.0 - propalpha) * jnp.einsum(
                "bvw,bcwt->bcvt", a, hcur)
            hops.append(hcur)
        ho = jnp.concatenate(hops, axis=1)                       # (B, (G+1)C, N, tau)
        outs.append(jnp.einsum("bknt,ok->bont", ho, wconv)
                    + bconv[None, :, None, None])
    return jnp.concatenate(outs, axis=-1)


if __name__ == "__main__":
    # Module hyper-parameters (small shapes consistent with Evolving_GConv).
    B, N, T = 2, 16, 32
    conv_channels = 32
    residual_channels = 32
    gcn_depth = 2
    st_embedding_dim = 16
    dy_embedding_dim = 16
    dy_interval = 8
    propalpha = 0.05

    key = jax.random.PRNGKey(0)
    kx, ks, kp = jax.random.split(key, 3)
    x = jax.random.normal(kx, (B, conv_channels, N, T), jnp.float32)
    st_node_fea = jax.random.normal(ks, (N, st_embedding_dim), jnp.float32)
    params = init_params(kp, conv_channels, residual_channels, gcn_depth,
                         st_embedding_dim, dy_embedding_dim)

    out = evolving_gconv_pallas(x, st_node_fea, params, dy_interval=dy_interval,
                                gcn_depth=gcn_depth, propalpha=propalpha)
    out = jax.block_until_ready(out)

    ref = evolving_gconv_reference(x, st_node_fea, params, dy_interval=dy_interval,
                                   gcn_depth=gcn_depth, propalpha=propalpha)
    max_err = float(jnp.max(jnp.abs(out - ref)))
    assert out.shape == (B, residual_channels, N, T), out.shape
    # bf16 matmul operands + approx reciprocal in the kernel vs an f32 reference
    # -> tolerance loosened accordingly (flagged in the perf review).
    assert jnp.allclose(out, ref, atol=5e-2, rtol=5e-2), max_err

    print("KERNEL_OK")
</pallas_src>

<mosaic_0001>
module attributes {stable_mosaic.version = 11 : i64} {
  func.func @_graph_state_kernel(%arg0: i32, %arg1: memref<1x32x32xf32, #tpu.memory_space<vmem>>, %arg2: memref<32x128xf32, #tpu.memory_space<vmem>>, %arg3: memref<32x384xf32, #tpu.memory_space<vmem>>, %arg4: memref<1x384xf32, #tpu.memory_space<vmem>>, %arg5: memref<128x384xf32, #tpu.memory_space<vmem>>, %arg6: memref<1x384xf32, #tpu.memory_space<vmem>>, %arg7: memref<128x256xf32, #tpu.memory_space<vmem>>, %arg8: memref<1x256xf32, #tpu.memory_space<vmem>>, %arg9: memref<1x2x16x16xbf16, #tpu.memory_space<vmem>>, %arg10: memref<32x128xf32, #tpu.memory_space<vmem>>) attributes {dimension_semantics = [#tpu.dimension_semantics<arbitrary>], iteration_bounds = array<i64: 4>, scalar_prefetch = 0 : i64, scratch_operands = 1 : i64, tpu.core_type = #tpu.core_type<tc>, window_params = [{transform_indices = @transform_0, window_bounds = array<i64: 1, 32, 32>}, {pipeline_mode = #tpu.pipeline_mode<synchronous>, transform_indices = @transform_1, window_bounds = array<i64: 32, 128>}, {pipeline_mode = #tpu.pipeline_mode<synchronous>, transform_indices = @transform_2, window_bounds = array<i64: 32, 384>}, {pipeline_mode = #tpu.pipeline_mode<synchronous>, transform_indices = @transform_3, window_bounds = array<i64: 1, 384>}, {pipeline_mode = #tpu.pipeline_mode<synchronous>, transform_indices = @transform_4, window_bounds = array<i64: 128, 384>}, {pipeline_mode = #tpu.pipeline_mode<synchronous>, transform_indices = @transform_5, window_bounds = array<i64: 1, 384>}, {pipeline_mode = #tpu.pipeline_mode<synchronous>, transform_indices = @transform_6, window_bounds = array<i64: 128, 256>}, {pipeline_mode = #tpu.pipeline_mode<synchronous>, transform_indices = @transform_7, window_bounds = array<i64: 1, 256>}, {transform_indices = @transform_8, window_bounds = array<i64: 1, 2, 16, 16>}]} {
    %c0_i32 = arith.constant 0 : i32
    %0 = arith.cmpi eq, %arg0, %c0_i32 : i32
    %1 = arith.extui %0 : i1 to i32
    %c0_i32_0 = arith.constant 0 : i32
    %2 = arith.cmpi ne, %1, %c0_i32_0 : i32
    scf.if %2 {
      %c0_34 = arith.constant 0 : index
      %c0_35 = arith.constant 0 : index
      %77 = vector.load %arg2[%c0_34, %c0_35] : memref<32x128xf32, #tpu.memory_space<vmem>>, vector<32x128xf32>
      %c0_36 = arith.constant 0 : index
      %c0_37 = arith.constant 0 : index
      %78 = vector.load %arg10[%c0_36, %c0_37] : memref<32x128xf32, #tpu.memory_space<vmem>>, vector<32x128xf32>
      tpu.vector_store %arg10[%c0_36, %c0_37], %77 {strides = array<i32>} : memref<32x128xf32, #tpu.memory_space<vmem>>, vector<32x128xf32>,
    } else {
    }
    %c0 = arith.constant 0 : index
    %c0_1 = arith.constant 0 : index
    %c0_2 = arith.constant 0 : index
    %3 = vector.load %arg1[%c0, %c0_1, %c0_2] : memref<1x32x32xf32, #tpu.memory_space<vmem>>, vector<1x32x32xf32>
    %4 = vector.shape_cast %3 : vector<1x32x32xf32> to vector<32x32xf32>
    %c0_3 = arith.constant 0 : index
    %c0_4 = arith.constant 0 : index
    %5 = vector.load %arg10[%c0_3, %c0_4] : memref<32x128xf32, #tpu.memory_space<vmem>>, vector<32x128xf32>
    %c0_5 = arith.constant 0 : index
    %c0_6 = arith.constant 0 : index
    %6 = vector.load %arg3[%c0_5, %c0_6] : memref<32x384xf32, #tpu.memory_space<vmem>>, vector<32x384xf32>
    %cst = arith.constant dense<0.000000e+00> : vector<32x384xf32>
    %7 = tpu.matmul %4, %6, %cst {dimension_numbers = #tpu.dot_dimension_numbers<[1], [0], [0], [1], [0, 0, 1, 1], [], []>} : vector<32x32xf32>, vector<32x384xf32>, vector<32x384xf32> -> vector<32x384xf32>
    %c0_7 = arith.constant 0 : index
    %c0_8 = arith.constant 0 : index
    %8 = vector.load %arg4[%c0_7, %c0_8] : memref<1x384xf32, #tpu.memory_space<vmem>>, vector<1x384xf32>
    %9 = vector.broadcast %8 : vector<1x384xf32> to vector<32x384xf32>
    %10 = arith.addf %7, %9 : vector<32x384xf32>
    %c0_9 = arith.constant 0 : index
    %c0_10 = arith.constant 0 : index
    %11 = vector.load %arg5[%c0_9, %c0_10] : memref<128x384xf32, #tpu.memory_space<vmem>>, vector<128x384xf32>
    %cst_11 = arith.constant dense<0.000000e+00> : vector<32x384xf32>
    %12 = tpu.matmul %5, %11, %cst_11 {dimension_numbers = #tpu.dot_dimension_numbers<[1], [0], [0], [1], [0, 0, 1, 1], [], []>} : vector<32x128xf32>, vector<128x384xf32>, vector<32x384xf32> -> vector<32x384xf32>
    %c0_12 = arith.constant 0 : index
    %c0_13 = arith.constant 0 : index
    %13 = vector.load %arg6[%c0_12, %c0_13] : memref<1x384xf32, #tpu.memory_space<vmem>>, vector<1x384xf32>
    %14 = vector.broadcast %13 : vector<1x384xf32> to vector<32x384xf32>
    %15 = arith.addf %12, %14 : vector<32x384xf32>
    %16 = vector.extract_strided_slice %10 {offsets = [0, 0], sizes = [32, 128], strides = [1, 1]} : vector<32x384xf32> to vector<32x128xf32>
    %17 = vector.extract_strided_slice %15 {offsets = [0, 0], sizes = [32, 128], strides = [1, 1]} : vector<32x384xf32> to vector<32x128xf32>
    %18 = arith.addf %16, %17 : vector<32x128xf32>
    %19 = arith.negf %18 : vector<32x128xf32>
    %20 = math.exp %19 : vector<32x128xf32>
    %cst_14 = arith.constant 1.000000e+00 : f32
    %21 = vector.broadcast %cst_14 : f32 to vector<32x128xf32>
    %22 = arith.addf %21, %20 : vector<32x128xf32>
    %23 = arith.divf %21, %22 : vector<32x128xf32>
    %24 = vector.extract_strided_slice %10 {offsets = [0, 128], sizes = [32, 128], strides = [1, 1]} : vector<32x384xf32> to vector<32x128xf32>
    %25 = vector.extract_strided_slice %15 {offsets = [0, 128], sizes = [32, 128], strides = [1, 1]} : vector<32x384xf32> to vector<32x128xf32>
    %26 = arith.addf %24, %25 : vector<32x128xf32>
    %27 = arith.negf %26 : vector<32x128xf32>
    %28 = math.exp %27 : vector<32x128xf32>
    %cst_15 = arith.constant 1.000000e+00 : f32
    %29 = vector.broadcast %cst_15 : f32 to vector<32x128xf32>
    %30 = arith.addf %29, %28 : vector<32x128xf32>
    %31 = arith.divf %29, %30 : vector<32x128xf32>
    %32 = vector.extract_strided_slice %10 {offsets = [0, 256], sizes = [32, 128], strides = [1, 1]} : vector<32x384xf32> to vector<32x128xf32>
    %33 = vector.extract_strided_slice %15 {offsets = [0, 256], sizes = [32, 128], strides = [1, 1]} : vector<32x384xf32> to vector<32x128xf32>
    %34 = arith.mulf %23, %33 : vector<32x128xf32>
    %35 = arith.addf %32, %34 : vector<32x128xf32>
    %36 = math.tanh %35 : vector<32x128xf32>
    %cst_16 = arith.constant 1.000000e+00 : f32
    %37 = vector.broadcast %cst_16 : f32 to vector<32x128xf32>
    %38 = arith.subf %37, %31 : vector<32x128xf32>
    %39 = arith.mulf %38, %36 : vector<32x128xf32>
    %40 = arith.mulf %31, %5 : vector<32x128xf32>
    %41 = arith.addf %39, %40 : vector<32x128xf32>
    %c0_17 = arith.constant 0 : index
    %c0_18 = arith.constant 0 : index
    %42 = vector.load %arg10[%c0_17, %c0_18] : memref<32x128xf32, #tpu.memory_space<vmem>>, vector<32x128xf32>
    tpu.vector_store %arg10[%c0_17, %c0_18], %41 {strides = array<i32>} : memref<32x128xf32, #tpu.memory_space<vmem>>, vector<32x128xf32>,
    %c0_19 = arith.constant 0 : index
    %c0_20 = arith.constant 0 : index
    %43 = vector.load %arg7[%c0_19, %c0_20] : memref<128x256xf32, #tpu.memory_space<vmem>>, vector<128x256xf32>
    %cst_21 = arith.constant dense<0.000000e+00> : vector<32x256xf32>
    %44 = tpu.matmul %41, %43, %cst_21 {dimension_numbers = #tpu.dot_dimension_numbers<[1], [0], [0], [1], [0, 0, 1, 1], [], []>} : vector<32x128xf32>, vector<128x256xf32>, vector<32x256xf32> -> vector<32x256xf32>
    %c0_22 = arith.constant 0 : index
    %c0_23 = arith.constant 0 : index
    %45 = vector.load %arg8[%c0_22, %c0_23] : memref<1x256xf32, #tpu.memory_space<vmem>>, vector<1x256xf32>
    %46 = vector.broadcast %45 : vector<1x256xf32> to vector<32x256xf32>
    %47 = arith.addf %44, %46 : vector<32x256xf32>
    %48 = math.tanh %47 : vector<32x256xf32>
    %49 = vector.extract_strided_slice %48 {offsets = [0, 0], sizes = [32, 128], strides = [1, 1]} : vector<32x256xf32> to vector<32x128xf32>
    %50 = vector.shape_cast %49 : vector<32x128xf32> to vector<2x16x128xf32>
    %51 = vector.extract_strided_slice %48 {offsets = [0, 128], sizes = [32, 128], strides = [1, 1]} : vector<32x256xf32> to vector<32x128xf32>
    %52 = vector.shape_cast %51 : vector<32x128xf32> to vector<2x16x128xf32>
    %cst_24 = arith.constant dense<0.000000e+00> : vector<2x16x16xf32>
    %53 = tpu.matmul %50, %52, %cst_24 {dimension_numbers = #tpu.dot_dimension_numbers<[2], [2], [1], [1], [0, 0, 0, 1, 1, 1], [0], [0]>} : vector<2x16x128xf32>, vector<2x16x128xf32>, vector<2x16x16xf32> -> vector<2x16x16xf32>
    %cst_25 = arith.constant dense<0.000000e+00> : vector<2x16x16xf32>
    %54 = tpu.matmul %52, %50, %cst_25 {dimension_numbers = #tpu.dot_dimension_numbers<[2], [2], [1], [1], [0, 0, 0, 1, 1, 1], [0], [0]>} : vector<2x16x128xf32>, vector<2x16x128xf32>, vector<2x16x16xf32> -> vector<2x16x16xf32>
    %55 = arith.subf %53, %54 : vector<2x16x16xf32>
    %56 = math.tanh %55 : vector<2x16x16xf32>
    %cst_26 = arith.constant 0.000000e+00 : f32
    %57 = vector.broadcast %cst_26 : f32 to vector<2x16x16xf32>
    %58 = arith.maximumf %56, %57 : vector<2x16x16xf32>
    %59 = tpu.iota {dimensions = array<i32: 0>} : vector<16x16xi32>
    %60 = tpu.iota {dimensions = array<i32: 1>} : vector<16x16xi32>
    %61 = arith.cmpi eq, %59, %60 : vector<16x16xi32>
    %cst_27 = arith.constant 1.000000e+00 : f32
    %cst_28 = arith.constant 0.000000e+00 : f32
    %62 = vector.broadcast %cst_27 : f32 to vector<16x16xf32>
    %63 = vector.broadcast %cst_28 : f32 to vector<16x16xf32>
    %64 = arith.select %61, %62, %63 : vector<16x16xi1>, vector<16x16xf32>
    %65 = vector.shape_cast %64 : vector<16x16xf32> to vector<1x16x16xf32>
    %66 = vector.broadcast %65 : vector<1x16x16xf32> to vector<2x16x16xf32>
    %67 = arith.addf %58, %66 : vector<2x16x16xf32>
    %cst_29 = arith.constant dense<0.000000e+00> : vector<2x16xf32>
    %68 = vector.multi_reduction <add>, %67, %cst_29 [2] : vector<2x16x16xf32> to vector<2x16xf32>
    %69 = vector.shape_cast %68 : vector<2x16xf32> to vector<2x16x1xf32>
    %70 = tpu.reciprocal %69 {approx = true} : vector<2x16x1xf32> -> vector<2x16x1xf32>
    %71 = vector.broadcast %70 : vector<2x16x1xf32> to vector<2x16x16xf32>
    %72 = arith.mulf %67, %71 : vector<2x16x16xf32>
    %73 = arith.truncf %72 : vector<2x16x16xf32> to vector<2x16x16xbf16>
    %c0_30 = arith.constant 0 : index
    %c0_31 = arith.constant 0 : index
    %c0_32 = arith.constant 0 : index
    %c0_33 = arith.constant 0 : index
    %74 = vector.load %arg9[%c0_30, %c0_31, %c0_32, %c0_33] : memref<1x2x16x16xbf16, #tpu.memory_space<vmem>>, vector<1x2x16x16xbf16>
    %75 = vector.shape_cast %74 : vector<1x2x16x16xbf16> to vector<2x16x16xbf16>
    %76 = vector.shape_cast %73 : vector<2x16x16xbf16> to vector<1x2x16x16xbf16>
    tpu.vector_store %arg9[%c0_30, %c0_31, %c0_32, %c0_33], %76 {strides = array<i32>} : memref<1x2x16x16xbf16, #tpu.memory_space<vmem>>, vector<1x2x16x16xbf16>,
    return
  }
  func.func @transform_0(%arg0: i32) -> (i32, i32, i32) {
    %c0_i32 = arith.constant 0 : i32
    %c0_i32_0 = arith.constant 0 : i32
    %c0_i32_1 = arith.constant 0 : i32
    return %arg0, %c0_i32, %c0_i32_0 : i32, i32, i32
  }
  func.func @transform_1(%arg0: i32) -> (i32, i32) {
    %c0_i32 = arith.constant 0 : i32
    %c0_i32_0 = arith.constant 0 : i32
    %c0_i32_1 = arith.constant 0 : i32
    return %c0_i32, %c0_i32_0 : i32, i32
  }
  func.func @transform_2(%arg0: i32) -> (i32, i32) {
    %c0_i32 = arith.constant 0 : i32
    %c0_i32_0 = arith.constant 0 : i32
    %c0_i32_1 = arith.constant 0 : i32
    return %c0_i32, %c0_i32_0 : i32, i32
  }
  func.func @transform_3(%arg0: i32) -> (i32, i32) {
    %c0_i32 = arith.constant 0 : i32
    %c0_i32_0 = arith.constant 0 : i32
    %c0_i32_1 = arith.constant 0 : i32
    return %c0_i32, %c0_i32_0 : i32, i32
  }
  func.func @transform_4(%arg0: i32) -> (i32, i32) {
    %c0_i32 = arith.constant 0 : i32
    %c0_i32_0 = arith.constant 0 : i32
    %c0_i32_1 = arith.constant 0 : i32
    return %c0_i32, %c0_i32_0 : i32, i32
  }
  func.func @transform_5(%arg0: i32) -> (i32, i32) {
    %c0_i32 = arith.constant 0 : i32
    %c0_i32_0 = arith.constant 0 : i32
    %c0_i32_1 = arith.constant 0 : i32
    return %c0_i32, %c0_i32_0 : i32, i32
  }
  func.func @transform_6(%arg0: i32) -> (i32, i32) {
    %c0_i32 = arith.constant 0 : i32
    %c0_i32_0 = arith.constant 0 : i32
    %c0_i32_1 = arith.constant 0 : i32
    return %c0_i32, %c0_i32_0 : i32, i32
  }
  func.func @transform_7(%arg0: i32) -> (i32, i32) {
    %c0_i32 = arith.constant 0 : i32
    %c0_i32_0 = arith.constant 0 : i32
    %c0_i32_1 = arith.constant 0 : i32
    return %c0_i32, %c0_i32_0 : i32, i32
  }
  func.func @transform_8(%arg0: i32) -> (i32, i32, i32, i32) {
    %c0_i32 = arith.constant 0 : i32
    %c0_i32_0 = arith.constant 0 : i32
    %c0_i32_1 = arith.constant 0 : i32
    %c0_i32_2 = arith.constant 0 : i32
    return %arg0, %c0_i32, %c0_i32_0, %c0_i32_1 : i32, i32, i32, i32
  }
}

</mosaic_0001>

<llo_original>
// kernel: tpu_custom_call.1
$region0: #{tpu_custom_call.1}
  #allocation0 [shape = 'u32[]', space=smem, size = 0x4, offset = 0x4, fixed_abs, tag = 'smem constant byte address 0x4 - core index']
  #allocation1 [shape = 'u32[144,128]{1,0:T(1,128)}', space=vmem, size = 0x12000, scoped, tag = 'internal scratch']
  #allocation2 [shape = 'f32[32,128]{1,0:T(8,128)}', space=vmem, size = 0x4000, scoped, tag = 'scratch operand']
  %s0 = inlined_call_operand.hbm [shape: f32[4,32,32], index: 0, kind: input, shape index: {}]
  %s1 = inlined_call_operand.hbm [shape: f32[32,128], index: 1, kind: input, shape index: {}]
  %s2 = inlined_call_operand.hbm [shape: f32[32,384], index: 2, kind: input, shape index: {}]
  %s3 = inlined_call_operand.vmem [shape: f32[1,384], index: 3, kind: input, shape index: {}]
  %s4 = inlined_call_operand.hbm [shape: f32[128,384], index: 4, kind: input, shape index: {}]
  %s5 = inlined_call_operand.vmem [shape: f32[1,384], index: 5, kind: input, shape index: {}]
  %s6 = inlined_call_operand.hbm [shape: f32[128,256], index: 6, kind: input, shape index: {}]
  %s7 = inlined_call_operand.vmem [shape: f32[1,256], index: 7, kind: input, shape index: {}]
  %s8 = inlined_call_operand.hbm [shape: bf16[4,2,16,16], index: 8, kind: output, shape index: {}]
  %s9 = sld [smem:[#allocation0]]
  $region89: #{tpu_custom_call.1} parent=0
    _
  %s11 = ssub.s32 1, %s9
  %s12 = scalar_select 0, %s11, %s9
  $region1: #{tpu_custom_call.1} parent=0
    #allocation3 [shape = 'u8[32768]{0}', space=vmem, size = 0x8000, scoped, tag = 'input window, operand 0']
    #allocation4 [shape = 's32[2]{0}', space=sflag, size = 0x8, scoped, tag = 'scoped memory for tpu_custom_call.1']
    #allocation5 [shape = 's32[2]{0}', space=sflag, size = 0x8, scoped, tag = 'scoped memory for tpu_custom_call.1']
    #allocation6 [shape = 'u8[16384]{0}', space=vmem, size = 0x4000, scoped, tag = 'input window, operand 1, single buffered']
    #allocation7 [shape = 's32[1]{0}', space=sflag, size = 0x4, scoped, tag = 'scoped memory for tpu_custom_call.1']
    #allocation8 [shape = 'u8[49152]{0}', space=vmem, size = 0xc000, scoped, tag = 'input window, operand 2, single buffered']
    #allocation9 [shape = 'u8[196608]{0}', space=vmem, size = 0x30000, scoped, tag = 'input window, operand 4, single buffered']
    #allocation10 [shape = 's32[1]{0}', space=sflag, size = 0x4, scoped, tag = 'scoped memory for tpu_custom_call.1']
    #allocation11 [shape = 'u8[131072]{0}', space=vmem, size = 0x20000, scoped, tag = 'input window, operand 6, single buffered']
    #allocation12 [shape = 'u8[16384]{0}', space=vmem, size = 0x4000, scoped, tag = 'output window, operand 0']
    %13 = vsyncpa [#allocation4], 0
    %s14 = scalar_lea.sflag [#allocation4], 1
    %15 = vsyncpa %s14, 0
    %16 = vsyncpa [#allocation7], 0
    %17 = vsyncpa [#allocation10], 0
    %18 = vsyncpa [#allocation5], 0
    %s19 = scalar_lea.sflag [#allocation5], 1
    %20 = vsyncpa %s19, 0
    loop: start=0, step=1, limit=6
    $region2: #{tpu_custom_call.1} parent=1 // loop_pre_header
      _
    $region3: #{tpu_custom_call.1} parent=1 // loop_header
      %s22 = sphi 0, %s26
      %p23 = scmp.ge.s32.totalorder %s22, 6
      %s32 = sphi 0, %s34
      %s35 = sphi 0, %s32
      %s36 = sphi 0, %s35
      %s52 = sphi 0, %s36
      %s56 = sphi 0, %s56
      %s58 = sphi 0, %s56
      %s59 = sphi 0, %s58
      %s73 = sphi 0, %s59
      %s77 = sphi 0, %s77
      %s79 = sphi 0, %s77
      %s80 = sphi 0, %s79
      %s94 = sphi 0, %s80
      %s98 = sphi 0, %s98
      %s100 = sphi 0, %s98
      %s101 = sphi 0, %s100
      %s115 = sphi 0, %s101
      %s119 = sphi 0, %s119
      %s121 = sphi 0, %s119
      %s122 = sphi 0, %s121
      %s136 = sphi 0, %s122
      %s140 = sphi 0, %s140
      %s142 = sphi 0, %s140
      %s143 = sphi 0, %s142
      %s157 = sphi 0, %s143
      %s161 = sphi 0, %s161
      %s163 = sphi 0, %s161
      %s164 = sphi 0, %s163
      %s178 = sphi 0, %s164
      %s182 = sphi 0, %s182
      %s184 = sphi 0, %s182
      %s185 = sphi 0, %s184
      %s199 = sphi 0, %s185
      %s205 = sphi 0, %s207
      %s208 = sphi 0, %s205
      %s209 = sphi 0, %s208
      %s225 = sphi 0, %s209
    $region4: #{tpu_custom_call.1} parent=1 // loop_header_branch
      %25 = sbr.rel (%p23) target = $region8
    $region5: #{tpu_custom_call.1} parent=1 // loop_body
      %s27 = ssub.s32 %s22, 1
      %s28 = ssub.s32 %s22, 2
      %s29 = sadd.s32 %s22, 1
      %s30 = ssub.s32 %s22, %s29
      %p31 = scmp.eq.s32.totalorder %s30, 0
      %s33 = sadd.s32 %s32, 1
      %s34 = scalar_select %p31, %s32, %s33
      %p37 = pneg %p31
      %p38 = scmp.eq.s32.totalorder %s22, 3
      %p39 = por %p37, %p38
      %p40 = scmp.ne.s32.totalorder %s32, %s35
      %p41 = scmp.eq.s32.totalorder %s22, 0
      %p42 = por %p40, %p41
      %p43 = scmp.ne.s32.totalorder %s32, %s35
      %p44 = scmp.eq.s32.totalorder %s27, 3
      %p45 = por %p43, %p44
      %p46 = scmp.ne.s32.totalorder %s35, %s36
      %p47 = scmp.eq.s32.totalorder %s27, 0
      %p48 = por %p46, %p47
      %p49 = scmp.ne.s32.totalorder %s35, %s36
      %p50 = scmp.eq.s32.totalorder %s28, 3
      %p51 = por %p49, %p50
      %p53 = scmp.ne.s32.totalorder %s36, %s52
      %p54 = scmp.eq.s32.totalorder %s28, 0
      %p55 = por %p53, %p54
      %s57 = sadd.s32 %s56, 1
      %p60 = scmp.eq.s32.totalorder %s22, 3
      %p61 = scmp.ne.s32.totalorder %s56, %s58
      %p62 = scmp.eq.s32.totalorder %s22, 0
      %p63 = por %p61, %p62
      %p64 = scmp.ne.s32.totalorder %s56, %s58
      %p65 = scmp.eq.s32.totalorder %s27, 3
      %p66 = por %p64, %p65
      %p67 = scmp.ne.s32.totalorder %s58, %s59
      %p68 = scmp.eq.s32.totalorder %s27, 0
      %p69 = por %p67, %p68
      %p70 = scmp.ne.s32.totalorder %s58, %s59
      %p71 = scmp.eq.s32.totalorder %s28, 3
      %p72 = por %p70, %p71
      %p74 = scmp.ne.s32.totalorder %s59, %s73
      %p75 = scmp.eq.s32.totalorder %s28, 0
      %p76 = por %p74, %p75
      %s78 = sadd.s32 %s77, 1
      %p81 = scmp.eq.s32.totalorder %s22, 3
      %p82 = scmp.ne.s32.totalorder %s77, %s79
      %p83 = scmp.eq.s32.totalorder %s22, 0
      %p84 = por %p82, %p83
      %p85 = scmp.ne.s32.totalorder %s77, %s79
      %p86 = scmp.eq.s32.totalorder %s27, 3
      %p87 = por %p85, %p86
      %p88 = scmp.ne.s32.totalorder %s79, %s80
      %p89 = scmp.eq.s32.totalorder %s27, 0
      %p90 = por %p88, %p89
      %p91 = scmp.ne.s32.totalorder %s79, %s80
      %p92 = scmp.eq.s32.totalorder %s28, 3
      %p93 = por %p91, %p92
      %p95 = scmp.ne.s32.totalorder %s80, %s94
      %p96 = scmp.eq.s32.totalorder %s28, 0
      %p97 = por %p95, %p96
      %s99 = sadd.s32 %s98, 1
      %p102 = scmp.eq.s32.totalorder %s22, 3
      %p103 = scmp.ne.s32.totalorder %s98, %s100
      %p104 = scmp.eq.s32.totalorder %s22, 0
      %p105 = por %p103, %p104
      %p106 = scmp.ne.s32.totalorder %s98, %s100
      %p107 = scmp.eq.s32.totalorder %s27, 3
      %p108 = por %p106, %p107
      %p109 = scmp.ne.s32.totalorder %s100, %s101
      %p110 = scmp.eq.s32.totalorder %s27, 0
      %p111 = por %p109, %p110
      %p112 = scmp.ne.s32.totalorder %s100, %s101
      %p113 = scmp.eq.s32.totalorder %s28, 3
      %p114 = por %p112, %p113
      %p116 = scmp.ne.s32.totalorder %s101, %s115
      %p117 = scmp.eq.s32.totalorder %s28, 0
      %p118 = por %p116, %p117
      %s120 = sadd.s32 %s119, 1
      %p123 = scmp.eq.s32.totalorder %s22, 3
      %p124 = scmp.ne.s32.totalorder %s119, %s121
      %p125 = scmp.eq.s32.totalorder %s22, 0
      %p126 = por %p124, %p125
      %p127 = scmp.ne.s32.totalorder %s119, %s121
      %p128 = scmp.eq.s32.totalorder %s27, 3
      %p129 = por %p127, %p128
      %p130 = scmp.ne.s32.totalorder %s121, %s122
      %p131 = scmp.eq.s32.totalorder %s27, 0
      %p132 = por %p130, %p131
      %p133 = scmp.ne.s32.totalorder %s121, %s122
      %p134 = scmp.eq.s32.totalorder %s28, 3
      %p135 = por %p133, %p134
      %p137 = scmp.ne.s32.totalorder %s122, %s136
      %p138 = scmp.eq.s32.totalorder %s28, 0
      %p139 = por %p137, %p138
      %s141 = sadd.s32 %s140, 1
      %p144 = scmp.eq.s32.totalorder %s22, 3
      %p145 = scmp.ne.s32.totalorder %s140, %s142
      %p146 = scmp.eq.s32.totalorder %s22, 0
      %p147 = por %p145, %p146
      %p148 = scmp.ne.s32.totalorder %s140, %s142
      %p149 = scmp.eq.s32.totalorder %s27, 3
      %p150 = por %p148, %p149
      %p151 = scmp.ne.s32.totalorder %s142, %s143
      %p152 = scmp.eq.s32.totalorder %s27, 0
      %p153 = por %p151, %p152
      %p154 = scmp.ne.s32.totalorder %s142, %s143
      %p155 = scmp.eq.s32.totalorder %s28, 3
      %p156 = por %p154, %p155
      %p158 = scmp.ne.s32.totalorder %s143, %s157
      %p159 = scmp.eq.s32.totalorder %s28, 0
      %p160 = por %p158, %p159
      %s162 = sadd.s32 %s161, 1
      %p165 = scmp.eq.s32.totalorder %s22, 3
      %p166 = scmp.ne.s32.totalorder %s161, %s163
      %p167 = scmp.eq.s32.totalorder %s22, 0
      %p168 = por %p166, %p167
      %p169 = scmp.ne.s32.totalorder %s161, %s163
      %p170 = scmp.eq.s32.totalorder %s27, 3
      %p171 = por %p169, %p170
      %p172 = scmp.ne.s32.totalorder %s163, %s164
      %p173 = scmp.eq.s32.totalorder %s27, 0
      %p174 = por %p172, %p173
      %p175 = scmp.ne.s32.totalorder %s163, %s164
      %p176 = scmp.eq.s32.totalorder %s28, 3
      %p177 = por %p175, %p176
      %p179 = scmp.ne.s32.totalorder %s164, %s178
      %p180 = scmp.eq.s32.totalorder %s28, 0
      %p181 = por %p179, %p180
      %s183 = sadd.s32 %s182, 1
      %p186 = scmp.eq.s32.totalorder %s22, 3
      %p187 = scmp.ne.s32.totalorder %s182, %s184
      %p188 = scmp.eq.s32.totalorder %s22, 0
      %p189 = por %p187, %p188
      %p190 = scmp.ne.s32.totalorder %s182, %s184
      %p191 = scmp.eq.s32.totalorder %s27, 3
      %p192 = por %p190, %p191
      %p193 = scmp.ne.s32.totalorder %s184, %s185
      %p194 = scmp.eq.s32.totalorder %s27, 0
      %p195 = por %p193, %p194
      %p196 = scmp.ne.s32.totalorder %s184, %s185
      %p197 = scmp.eq.s32.totalorder %s28, 3
      %p198 = por %p196, %p197
      %p200 = scmp.ne.s32.totalorder %s185, %s199
      %p201 = scmp.eq.s32.totalorder %s28, 0
      %p202 = por %p200, %p201
      %s203 = ssub.s32 %s22, %s29
      %p204 = scmp.eq.s32.totalorder %s203, 0
      %s206 = sadd.s32 %s205, 1
      %s207 = scalar_select %p204, %s205, %s206
      %p210 = pneg %p204
      %p211 = scmp.eq.s32.totalorder %s22, 3
      %p212 = por %p210, %p211
      %p213 = scmp.ne.s32.totalorder %s205, %s208
      %p214 = scmp.eq.s32.totalorder %s22, 0
      %p215 = por %p213, %p214
      %p216 = scmp.ne.s32.totalorder %s205, %s208
      %p217 = scmp.eq.s32.totalorder %s27, 3
      %p218 = por %p216, %p217
      %p219 = scmp.ne.s32.totalorder %s208, %s209
      %p220 = scmp.eq.s32.totalorder %s27, 0
      %p221 = por %p219, %p220
      %p222 = scmp.ne.s32.totalorder %s208, %s209
      %p223 = scmp.eq.s32.totalorder %s28, 3
      %p224 = por %p222, %p223
      %p226 = scmp.ne.s32.totalorder %s209, %s225
      %p227 = scmp.eq.s32.totalorder %s28, 0
      %p228 = por %p226, %p227
      %p229 = scmp.le.s32.totalorder 1, %s22
      %p230 = scmp.lt.s32.totalorder %s22, 5
      %p231 = pnand %p229, %p230
      %p232 = pneg %p231
      // Predicated region
      $region9: #{tpu_custom_call.1} parent=5 // pred_check
        _
      $region10: #{tpu_custom_call.1} parent=5 // pred_check_branch
        %234 = sbr.rel (%p231) target = $region12
      $region11: #{tpu_custom_call.1} parent=5 // pred_region
        %s235 = ssub.s32 %s22, 1
        // Predicated region
        $region13: #{tpu_custom_call.1} parent=11 // pred_check
          %p236 = pneg %p69
        $region14: #{tpu_custom_call.1} parent=11 // pred_check_branch
          %238 = sbr.rel (%p236) target = $region16
        $region15: #{tpu_custom_call.1} parent=11 // pred_region
          %s240 = ssub.s32 512, 512
          %241 = vsyncadd [#allocation7], %s240
          %s242 = sshll.u32 [#allocation6], 4
          %s243 = int_to_ptr.vmem [resolvable:$true] %s242
          %248 = dma.hbm_to_vmem [thread:$0]  %s1, 512, %s243, [#allocation7], 128, 128, 8
        $region16: #{tpu_custom_call.1} parent=11 // pred_fallthru
          _
        // Predicated region
        $region17: #{tpu_custom_call.1} parent=11 // pred_check
          %p249 = pneg %p90
        $region18: #{tpu_custom_call.1} parent=11 // pred_check_branch
          %251 = sbr.rel (%p249) target = $region20
        $region19: #{tpu_custom_call.1} parent=11 // pred_region
          %s253 = ssub.s32 1536, 1536
          %254 = vsyncadd [#allocation7], %s253
          %s255 = sshll.u32 [#allocation8], 4
          %s256 = int_to_ptr.vmem [resolvable:$true] %s255
          %261 = dma.hbm_to_vmem [thread:$0]  %s2, 1536, %s256, [#allocation7], 384, 384, 24
        $region20: #{tpu_custom_call.1} parent=11 // pred_fallthru
          _
        // Predicated region
        $region21: #{tpu_custom_call.1} parent=11 // pred_check
          %p262 = pneg %p111
        $region22: #{tpu_custom_call.1} parent=11 // pred_check_branch
          %264 = sbr.rel (%p262) target = $region24
        $region23: #{tpu_custom_call.1} parent=11 // pred_region
          _
        $region24: #{tpu_custom_call.1} parent=11 // pred_fallthru
          _
        // Predicated region
        $region25: #{tpu_custom_call.1} parent=11 // pred_check
          %p265 = pneg %p132
        $region26: #{tpu_custom_call.1} parent=11 // pred_check_branch
          %267 = sbr.rel (%p265) target = $region28
        $region27: #{tpu_custom_call.1} parent=11 // pred_region
          %s269 = ssub.s32 6144, 6144
          %270 = vsyncadd [#allocation10], %s269
          %s271 = sshll.u32 [#allocation9], 4
          %s272 = int_to_ptr.vmem [resolvable:$true] %s271
          %277 = dma.hbm_to_vmem [thread:$0]  %s4, 6144, %s272, [#allocation10], 384, 384, 24
        $region28: #{tpu_custom_call.1} parent=11 // pred_fallthru
          _
        // Predicated region
        $region29: #{tpu_custom_call.1} parent=11 // pred_check
          %p278 = pneg %p153
        $region30: #{tpu_custom_call.1} parent=11 // pred_check_branch
          %280 = sbr.rel (%p278) target = $region32
        $region31: #{tpu_custom_call.1} parent=11 // pred_region
          _
        $region32: #{tpu_custom_call.1} parent=11 // pred_fallthru
          _
        // Predicated region
        $region33: #{tpu_custom_call.1} parent=11 // pred_check
          %p281 = pneg %p174
        $region34: #{tpu_custom_call.1} parent=11 // pred_check_branch
          %283 = sbr.rel (%p281) target = $region36
        $region35: #{tpu_custom_call.1} parent=11 // pred_region
          %s285 = ssub.s32 4096, 4096
          %286 = vsyncadd [#allocation10], %s285
          %s287 = sshll.u32 [#allocation11], 4
          %s288 = int_to_ptr.vmem [resolvable:$true] %s287
          %293 = dma.hbm_to_vmem [thread:$0]  %s6, 4096, %s288, [#allocation10], 256, 256, 16
        $region36: #{tpu_custom_call.1} parent=11 // pred_fallthru
          _
        // Predicated region
        $region37: #{tpu_custom_call.1} parent=11 // pred_check
          %p294 = pneg %p195
        $region38: #{tpu_custom_call.1} parent=11 // pred_check_branch
          %296 = sbr.rel (%p294) target = $region40
        $region39: #{tpu_custom_call.1} parent=11 // pred_region
          _
        $region40: #{tpu_custom_call.1} parent=11 // pred_fallthru
          _
      $region12: #{tpu_custom_call.1} parent=5 // pred_fallthru
        _
      %p297 = scmp.lt.s32.totalorder %s22, 4
      // Predicated region
      $region41: #{tpu_custom_call.1} parent=5 // pred_check
        %p298 = pneg %p297
      $region42: #{tpu_custom_call.1} parent=5 // pred_check_branch
        %300 = sbr.rel (%p298) target = $region44
      $region43: #{tpu_custom_call.1} parent=5 // pred_region
        // Predicated region
        $region45: #{tpu_custom_call.1} parent=43 // pred_check
          %p301 = pneg %p42
        $region46: #{tpu_custom_call.1} parent=43 // pred_check_branch
          %303 = sbr.rel (%p301) target = $region48
        $region47: #{tpu_custom_call.1} parent=43 // pred_region
          %s304 = sand.u32 %s32, 1
          %s305 = scalar_lea.sflag [#allocation4], %s304
          %s306 = sand.u32 %s32, 1
          %s307 = smul.addr %s306, 32
          %s308 = scalar_lea.vmem [#allocation3], %s307
          %s310 = ssub.s32 512, 512
          %311 = vsyncadd %s305, %s310
          %s312 = smul.addr %s22, 4
          %s313 = smul.addr %s312, 128
          %s314 = scalar_lea.hbm %s0, %s313
          %s315 = sshll.u32 %s308, 4
          %s316 = int_to_ptr.vmem [resolvable:$true] %s315
          %321 = dma.hbm_to_vmem [thread:$0]  %s314, 512, %s316, %s305, 128, 128, 8
        $region48: #{tpu_custom_call.1} parent=43 // pred_fallthru
          _
      $region44: #{tpu_custom_call.1} parent=5 // pred_fallthru
        _
      %p322 = scmp.le.s32.totalorder 1, %s22
      %p323 = scmp.lt.s32.totalorder %s22, 5
      %p324 = pnand %p322, %p323
      %p325 = pneg %p324
      // Predicated region
      $region49: #{tpu_custom_call.1} parent=5 // pred_check
        _
      $region50: #{tpu_custom_call.1} parent=5 // pred_check_branch
        %327 = sbr.rel (%p324) target = $region52
      $region51: #{tpu_custom_call.1} parent=5 // pred_region
        %s328 = ssub.s32 %s22, 1
        %s329 = sand.u32 %s35, 1
        %s330 = scalar_lea.sflag [#allocation4], %s329
        %s331 = sand.u32 %s35, 1
        %s332 = smul.addr %s331, 32
        %s333 = scalar_lea.vmem [#allocation3], %s332
        // Predicated region
        $region53: #{tpu_custom_call.1} parent=51 // pred_check
          %p334 = pneg %p48
        $region54: #{tpu_custom_call.1} parent=51 // pred_check_branch
          %336 = sbr.rel (%p334) target = $region56
        $region55: #{tpu_custom_call.1} parent=51 // pred_region
          %337 = dma.done %s330, 512
        $region56: #{tpu_custom_call.1} parent=51 // pred_fallthru
          _
        // Predicated region
        $region57: #{tpu_custom_call.1} parent=51 // pred_check
          %p338 = pneg %p69
        $region58: #{tpu_custom_call.1} parent=51 // pred_check_branch
          %340 = sbr.rel (%p338) target = $region60
        $region59: #{tpu_custom_call.1} parent=51 // pred_region
          %341 = dma.done [#allocation7], 512
        $region60: #{tpu_custom_call.1} parent=51 // pred_fallthru
          _
        // Predicated region
        $region61: #{tpu_custom_call.1} parent=51 // pred_check
          %p342 = pneg %p90
        $region62: #{tpu_custom_call.1} parent=51 // pred_check_branch
          %344 = sbr.rel (%p342) target = $region64
        $region63: #{tpu_custom_call.1} parent=51 // pred_region
          %345 = dma.done [#allocation7], 1536
        $region64: #{tpu_custom_call.1} parent=51 // pred_fallthru
          _
        // Predicated region
        $region65: #{tpu_custom_call.1} parent=51 // pred_check
          %p346 = pneg %p132
        $region66: #{tpu_custom_call.1} parent=51 // pred_check_branch
          %348 = sbr.rel (%p346) target = $region68
        $region67: #{tpu_custom_call.1} parent=51 // pred_region
          %349 = dma.done [#allocation10], 6144
        $region68: #{tpu_custom_call.1} parent=51 // pred_fallthru
          _
        // Predicated region
        $region69: #{tpu_custom_call.1} parent=51 // pred_check
          %p350 = pneg %p174
        $region70: #{tpu_custom_call.1} parent=51 // pred_check_branch
          %352 = sbr.rel (%p350) target = $region72
        $region71: #{tpu_custom_call.1} parent=51 // pred_region
          %353 = dma.done [#allocation10], 4096
        $region72: #{tpu_custom_call.1} parent=51 // pred_fallthru
          _
        %s354 = sand.u32 %s35, 1
        %s355 = scalar_lea.sflag [#allocation4], %s354
        %s356 = sand.u32 %s35, 1
        %s357 = smul.addr %s356, 32
        %s358 = scalar_lea.vmem [#allocation3], %s357
        %p359 = pneg %p48
        %p360 = pneg %p45
        %p361 = pneg %p69
        %p362 = pneg %p66
        %p363 = pneg %p90
        %p364 = pneg %p87
        %p365 = pneg %p111
        %p366 = pneg %p108
        %p367 = pneg %p132
        %p368 = pneg %p129
        %p369 = pneg %p153
        %p370 = pneg %p150
        %p371 = pneg %p174
        %p372 = pneg %p171
        %p373 = pneg %p195
        %p374 = pneg %p192
        %p375 = pneg %p221
        %p376 = pneg %p218
        %s377 = sand.u32 %s208, 1
        %s378 = scalar_lea.sflag [#allocation5], %s377
        %s379 = sand.u32 %s208, 1
        %s380 = smul.addr %s379, 16
        %s381 = scalar_lea.vmem [#allocation12], %s380
        %p382 = scmp.eq.s32.totalorder %s27, 0
        // Predicated region
        $region73: #{tpu_custom_call.1} parent=51 // pred_check
          %p383 = pneg %p382
        $region74: #{tpu_custom_call.1} parent=51 // pred_check_branch
          %385 = sbr.rel (%p383) target = $region76
        $region75: #{tpu_custom_call.1} parent=51 // pred_region
          %v386 = vld [vmem:[#allocation6] sm:$0xff]
          %v387 = vld [vmem:[#allocation6 + $0x8] sm:$0xff]
          %v388 = vld [vmem:[#allocation6 + $0x10] sm:$0xff]
          %v389 = vld [vmem:[#allocation6 + $0x18] sm:$0xff]
          %390 = vst [vmem:[#allocation2] sm:$0xff] %v386
          %391 = vst [vmem:[#allocation2 + $0x8] sm:$0xff] %v387
          %392 = vst [vmem:[#allocation2 + $0x10] sm:$0xff] %v388
          %393 = vst [vmem:[#allocation2 + $0x18] sm:$0xff] %v389
        $region76: #{tpu_custom_call.1} parent=51 // pred_fallthru
          _
        %v394 = vld [vmem:[%s333] sm:$0xff]
        %v395 = vld [vmem:[%s333 + $0x8] sm:$0xff]
        %v396 = vld [vmem:[%s333 + $0x10] sm:$0xff]
        %v397 = vld [vmem:[%s333 + $0x18] sm:$0xff]
        %v398 = vld [vmem:[#allocation2] sm:$0xff]
        %v399 = vld [vmem:[#allocation2 + $0x8] sm:$0xff]
        %v400 = vld [vmem:[#allocation2 + $0x10] sm:$0xff]
        %v401 = vld [vmem:[#allocation2 + $0x18] sm:$0xff]
        %v402 = vld [vmem:[#allocation8] sm:$0xff]
        %v403 = vld [vmem:[#allocation8 + $0x8] sm:$0xff]
        %v404 = vld [vmem:[#allocation8 + $0x10] sm:$0xff]
        %v405 = vld [vmem:[#allocation8 + $0x18] sm:$0xff]
        %v406 = vld [vmem:[#allocation8 + $0x20] sm:$0xff]
        %v407 = vld [vmem:[#allocation8 + $0x28] sm:$0xff]
        %v408 = vld [vmem:[#allocation8 + $0x30] sm:$0xff]
        %v409 = vld [vmem:[#allocation8 + $0x38] sm:$0xff]
        %v410 = vld [vmem:[#allocation8 + $0x40] sm:$0xff]
        %v411 = vld [vmem:[#allocation8 + $0x48] sm:$0xff]
        %v412 = vld [vmem:[#allocation8 + $0x50] sm:$0xff]
        %v413 = vld [vmem:[#allocation8 + $0x58] sm:$0xff]
        %v414 = vld [vmem:[%s3] sm:$0x7]
        %v416 = vlaneseq
        %v417 = vshrl.u32 %v416, 7
        %v418 = vsub.s32 0, %v417
        %v419 = vrot.slane %v414, %v418
        %v420 = vlaneseq
        %v421 = vshrl.u32 %v420, 7
        %v422 = vsub.s32 1, %v421
        %v423 = vrot.slane %v414, %v422
        %v424 = vlaneseq
        %v425 = vshrl.u32 %v424, 7
        %v426 = vsub.s32 2, %v425
        %v427 = vrot.slane %v414, %v426
        %vm431 = vcmask 261120
        %v433 = vsel %vm431, %v394, 0
        %v436 = vsel %vm431, %v395, 0
        %v439 = vsel %vm431, %v396, 0
        %v442 = vsel %vm431, %v397, 0
        %444 = vmatprep.subr.mxu0 %v403
        %445 = vmatpush1.msra.mxu0 %v402
        %446 = vmatprep.subr.mxu0 %v406
        %447 = vmatpush1.msra.mxu0 %v405
        %448 = vmatprep.subr.mxu0 %v409
        %449 = vmatpush1.msra.mxu0 %v408
        %450 = vmatprep.subr.mxu0 %v412
        %451 = vmatpush1.msra.mxu0 %v411
        %452 = vmatprep.subr.mxu0 0.0
        %453 = vmatpush1.msra.mxu0 0.0
        %454 = vmatprep.subr.mxu0 0.0
        %455 = vmatpush1.msra.mxu0 0.0
        %456 = vmatprep.subr.mxu0 0.0
        %457 = vmatpush1.msra.mxu0 0.0
        %458 = vmatprep.subr.mxu0 0.0
        %459 = vmatpush1.msra.mxu0 0.0
        %460 = vmatprep.subr.mxu0 0.0
        %461 = vmatpush1.msra.mxu0 0.0
        %462 = vmatprep.subr.mxu0 0.0
        %463 = vmatpush1.msra.mxu0 0.0
        %464 = vmatprep.subr.mxu0 0.0
        %465 = vmatpush1.msra.mxu0 0.0
        %466 = vmatprep.subr.mxu0 0.0
        %467 = vmatpush1.msra.mxu0 0.0
        %468 = vmatprep.subr.mxu0 0.0
        %469 = vmatpush1.msra.mxu0 0.0
        %470 = vmatprep.subr.mxu0 0.0
        %471 = vmatpush1.msra.mxu0 0.0
        %472 = vmatprep.subr.mxu0 0.0
        %473 = vmatpush1.msra.mxu0 0.0
        %474 = vmatprep.subr.mxu0 0.0
        %475 = vmatpush1.msra.mxu0 0.0
        %476 = vmatprep.subr.mxu0 0.0
        %477 = vmatpush1.msra.mxu0 0.0
        %478 = vmatprep.subr.mxu0 0.0
        %479 = vmatpush1.msra.mxu0 0.0
        %480 = vmatprep.subr.mxu0 0.0
        %481 = vmatpush1.msra.mxu0 0.0
        %482 = vmatprep.subr.mxu0 0.0
        %483 = vmatpush1.msra.mxu0 0.0
        %484 = vmatprep.subr.mxu0 0.0
        %485 = vmatpush1.msra.mxu0 0.0
        %486 = vmatprep.subr.mxu0 0.0
        %487 = vmatpush1.msra.mxu0 0.0
        %488 = vmatprep.subr.mxu0 0.0
        %489 = vmatpush1.msra.mxu0 0.0
        %490 = vmatprep.subr.mxu0 0.0
        %491 = vmatpush1.msra.mxu0 0.0
        %492 = vmatprep.subr.mxu0 0.0
        %493 = vmatpush1.msra.mxu0 0.0
        %494 = vmatprep.subr.mxu0 0.0
        %495 = vmatpush1.msra.mxu0 0.0
        %496 = vmatprep.subr.mxu0 0.0
        %497 = vmatpush1.msra.mxu0 0.0
        %498 = vmatprep.subr.mxu0 0.0
        %499 = vmatpush1.msra.mxu0 0.0
        %500 = vmatprep.subr.mxu0 0.0
        %501 = vmatpush1.msra.mxu0 0.0
        %502 = vmatprep.subr.mxu0 0.0
        %503 = vmatpush1.msra.mxu0 0.0
        %504 = vmatprep.subr.mxu0 0.0
        %505 = vmatpush1.msra.mxu0 0.0
        %506 = vmatprep.subr.mxu0 0.0
        %507 = vmatpush1.msra.mxu0 0.0
        %508 = vmatprep.mubr.f32.mxu0 0.0
        %509 = vmatmul.mubr.f32.gmra.mrb[0].mxu0 %v433
        %v510 = vpop.f32.mrb[0].mxu0
        %v511 = vadd.f32 %v419, %v510
        %v512 = vpop.f32.mrb[0].mxu0
        %v513 = vadd.f32 %v423, %v512
        %514 = vmatprep.mubr.f32.mxu0 0.0
        %515 = vmatmul.mubr.f32.gmra.mrb[0].mxu0 %v436
        %v516 = vpop.f32.mrb[0].mxu0
        %v517 = vadd.f32 %v419, %v516
        %v518 = vpop.f32.mrb[0].mxu0
        %v519 = vadd.f32 %v423, %v518
        %520 = vmatprep.mubr.f32.mxu0 0.0
        %521 = vmatmul.mubr.f32.gmra.mrb[0].mxu0 %v439
        %v522 = vpop.f32.mrb[0].mxu0
        %v523 = vadd.f32 %v419, %v522
        %v524 = vpop.f32.mrb[0].mxu0
        %v525 = vadd.f32 %v423, %v524
        %526 = vmatprep.mubr.f32.mxu0 0.0
        %527 = vmatmul.mubr.f32.gmra.mrb[0].mxu0 %v442
        %v528 = vpop.f32.mrb[0].mxu0
        %v529 = vadd.f32 %v419, %v528
        %v530 = vpop.f32.mrb[0].mxu0
        %v531 = vadd.f32 %v423, %v530
        %532 = vdwg.mxu0
        %533 = vmatprep.subr.mxu0 0.0
        %534 = vmatpush1.msra.mxu0 %v404
        %535 = vmatprep.subr.mxu0 0.0
        %536 = vmatpush1.msra.mxu0 %v407
        %537 = vmatprep.subr.mxu0 0.0
        %538 = vmatpush1.msra.mxu0 %v410
        %539 = vmatprep.subr.mxu0 0.0
        %540 = vmatpush1.msra.mxu0 %v413
        %541 = vmatprep.subr.mxu0 0.0
        %542 = vmatpush1.msra.mxu0 0.0
        %543 = vmatprep.subr.mxu0 0.0
        %544 = vmatpush1.msra.mxu0 0.0
        %545 = vmatprep.subr.mxu0 0.0
        %546 = vmatpush1.msra.mxu0 0.0
        %547 = vmatprep.subr.mxu0 0.0
        %548 = vmatpush1.msra.mxu0 0.0
        %549 = vmatprep.subr.mxu0 0.0
        %550 = vmatpush1.msra.mxu0 0.0
        %551 = vmatprep.subr.mxu0 0.0
        %552 = vmatpush1.msra.mxu0 0.0
        %553 = vmatprep.subr.mxu0 0.0
        %554 = vmatpush1.msra.mxu0 0.0
        %555 = vmatprep.subr.mxu0 0.0
        %556 = vmatpush1.msra.mxu0 0.0
        %557 = vmatprep.subr.mxu0 0.0
        %558 = vmatpush1.msra.mxu0 0.0
        %559 = vmatprep.subr.mxu0 0.0
        %560 = vmatpush1.msra.mxu0 0.0
        %561 = vmatprep.subr.mxu0 0.0
        %562 = vmatpush1.msra.mxu0 0.0
        %563 = vmatprep.subr.mxu0 0.0
        %564 = vmatpush1.msra.mxu0 0.0
        %565 = vmatprep.subr.mxu0 0.0
        %566 = vmatpush1.msra.mxu0 0.0
        %567 = vmatprep.subr.mxu0 0.0
        %568 = vmatpush1.msra.mxu0 0.0
        %569 = vmatprep.subr.mxu0 0.0
        %570 = vmatpush1.msra.mxu0 0.0
        %571 = vmatprep.subr.mxu0 0.0
        %572 = vmatpush1.msra.mxu0 0.0
        %573 = vmatprep.subr.mxu0 0.0
        %574 = vmatpush1.msra.mxu0 0.0
        %575 = vmatprep.subr.mxu0 0.0
        %576 = vmatpush1.msra.mxu0 0.0
        %577 = vmatprep.subr.mxu0 0.0
        %578 = vmatpush1.msra.mxu0 0.0
        %579 = vmatprep.subr.mxu0 0.0
        %580 = vmatpush1.msra.mxu0 0.0
        %581 = vmatprep.subr.mxu0 0.0
        %582 = vmatpush1.msra.mxu0 0.0
        %583 = vmatprep.subr.mxu0 0.0
        %584 = vmatpush1.msra.mxu0 0.0
        %585 = vmatprep.subr.mxu0 0.0
        %586 = vmatpush1.msra.mxu0 0.0
        %587 = vmatprep.subr.mxu0 0.0
        %588 = vmatpush1.msra.mxu0 0.0
        %589 = vmatprep.subr.mxu0 0.0
        %590 = vmatpush1.msra.mxu0 0.0
        %591 = vmatprep.subr.mxu0 0.0
        %592 = vmatpush1.msra.mxu0 0.0
        %593 = vmatprep.subr.mxu0 0.0
        %594 = vmatpush1.msra.mxu0 0.0
        %595 = vmatprep.subr.mxu0 0.0
        %596 = vmatpush1.msra.mxu0 0.0
        %597 = vmatprep.mubr.f32.mxu0 0.0
        %598 = vmatmul.mubr.f32.gmra.mrb[0].mxu0 %v433
        %v599 = vpop.f32.mrb[0].mxu0
        %v600 = vadd.f32 %v427, %v599
        %v601 = vpop.f32.mrb[0].mxu0
        %602 = vmatprep.mubr.f32.mxu0 0.0
        %603 = vmatmul.mubr.f32.gmra.mrb[0].mxu0 %v436
        %v604 = vpop.f32.mrb[0].mxu0
        %v605 = vadd.f32 %v427, %v604
        %v606 = vpop.f32.mrb[0].mxu0
        %607 = vmatprep.mubr.f32.mxu0 0.0
        %608 = vmatmul.mubr.f32.gmra.mrb[0].mxu0 %v439
        %v609 = vpop.f32.mrb[0].mxu0
        %v610 = vadd.f32 %v427, %v609
        %v611 = vpop.f32.mrb[0].mxu0
        %612 = vmatprep.mubr.f32.mxu0 0.0
        %613 = vmatmul.mubr.f32.gmra.mrb[0].mxu0 %v442
        %v614 = vpop.f32.mrb[0].mxu0
        %v615 = vadd.f32 %v427, %v614
        %v616 = vpop.f32.mrb[0].mxu0
        %617 = vdwg.mxu0
        %v618 = vld [vmem:[#allocation9] sm:$0xff]
        %v619 = vld [vmem:[#allocation9 + $0x8] sm:$0xff]
        %v620 = vld [vmem:[#allocation9 + $0x10] sm:$0xff]
        %v621 = vld [vmem:[#allocation9 + $0x18] sm:$0xff]
        %v622 = vld [vmem:[#allocation9 + $0x20] sm:$0xff]
        %v623 = vld [vmem:[#allocation9 + $0x28] sm:$0xff]
        %v624 = vld [vmem:[#allocation9 + $0x30] sm:$0xff]
        %v625 = vld [vmem:[#allocation9 + $0x38] sm:$0xff]
        %v626 = vld [vmem:[#allocation9 + $0x40] sm:$0xff]
        %v627 = vld [vmem:[#allocation9 + $0x48] sm:$0xff]
        %v628 = vld [vmem:[#allocation9 + $0x50] sm:$0xff]
        %v629 = vld [vmem:[#allocation9 + $0x58] sm:$0xff]
        %v630 = vld [vmem:[#allocation9 + $0x60] sm:$0xff]
        %v631 = vld [vmem:[#allocation9 + $0x68] sm:$0xff]
        %v632 = vld [vmem:[#allocation9 + $0x70] sm:$0xff]
        %v633 = vld [vmem:[#allocation9 + $0x78] sm:$0xff]
        %v634 = vld [vmem:[#allocation9 + $0x80] sm:$0xff]
        %v635 = vld [vmem:[#allocation9 + $0x88] sm:$0xff]
        %v636 = vld [vmem:[#allocation9 + $0x90] sm:$0xff]
        %v637 = vld [vmem:[#allocation9 + $0x98] sm:$0xff]
        %v638 = vld [vmem:[#allocation9 + $0xa0] sm:$0xff]
        %v639 = vld [vmem:[#allocation9 + $0xa8] sm:$0xff]
        %v640 = vld [vmem:[#allocation9 + $0xb0] sm:$0xff]
        %v641 = vld [vmem:[#allocation9 + $0xb8] sm:$0xff]
        %v642 = vld [vmem:[#allocation9 + $0xc0] sm:$0xff]
        %v643 = vld [vmem:[#allocation9 + $0xc8] sm:$0xff]
        %v644 = vld [vmem:[#allocation9 + $0xd0] sm:$0xff]
        %v645 = vld [vmem:[#allocation9 + $0xd8] sm:$0xff]
        %v646 = vld [vmem:[#allocation9 + $0xe0] sm:$0xff]
        %v647 = vld [vmem:[#allocation9 + $0xe8] sm:$0xff]
        %v648 = vld [vmem:[#allocation9 + $0xf0] sm:$0xff]
        %v649 = vld [vmem:[#allocation9 + $0xf8] sm:$0xff]
        %v650 = vld [vmem:[#allocation9 + $0x100] sm:$0xff]
        %v651 = vld [vmem:[#allocation9 + $0x108] sm:$0xff]
        %v652 = vld [vmem:[#allocation9 + $0x110] sm:$0xff]
        %v653 = vld [vmem:[#allocation9 + $0x118] sm:$0xff]
        %v654 = vld [vmem:[#allocation9 + $0x120] sm:$0xff]
        %v655 = vld [vmem:[#allocation9 + $0x128] sm:$0xff]
        %v656 = vld [vmem:[#allocation9 + $0x130] sm:$0xff]
        %v657 = vld [vmem:[#allocation9 + $0x138] sm:$0xff]
        %v658 = vld [vmem:[#allocation9 + $0x140] sm:$0xff]
        %v659 = vld [vmem:[#allocation9 + $0x148] sm:$0xff]
        %v660 = vld [vmem:[#allocation9 + $0x150] sm:$0xff]
        %v661 = vld [vmem:[#allocation9 + $0x158] sm:$0xff]
        %v662 = vld [vmem:[#allocation9 + $0x160] sm:$0xff]
        %v663 = vld [vmem:[#allocation9 + $0x168] sm:$0xff]
        %v664 = vld [vmem:[#allocation9 + $0x170] sm:$0xff]
        %v665 = vld [vmem:[#allocation9 + $0x178] sm:$0xff]
        %v666 = vld [vmem:[%s5] sm:$0x7]
        %v668 = vlaneseq
        %v669 = vshrl.u32 %v668, 7
        %v670 = vsub.s32 0, %v669
        %v671 = vrot.slane %v666, %v670
        %v672 = vlaneseq
        %v673 = vshrl.u32 %v672, 7
        %v674 = vsub.s32 1, %v673
        %v675 = vrot.slane %v666, %v674
        %v676 = vlaneseq
        %v677 = vshrl.u32 %v676, 7
        %v678 = vsub.s32 2, %v677
        %v679 = vrot.slane %v666, %v678
        %683 = vmatprep.subr.mxu0 %v619
        %684 = vmatpush1.msra.mxu0 %v618
        %685 = vmatprep.subr.mxu0 %v622
        %686 = vmatpush1.msra.mxu0 %v621
        %687 = vmatprep.subr.mxu0 %v625
        %688 = vmatpush1.msra.mxu0 %v624
        %689 = vmatprep.subr.mxu0 %v628
        %690 = vmatpush1.msra.mxu0 %v627
        %691 = vmatprep.subr.mxu0 %v631
        %692 = vmatpush1.msra.mxu0 %v630
        %693 = vmatprep.subr.mxu0 %v634
        %694 = vmatpush1.msra.mxu0 %v633
        %695 = vmatprep.subr.mxu0 %v637
        %696 = vmatpush1.msra.mxu0 %v636
        %697 = vmatprep.subr.mxu0 %v640
        %698 = vmatpush1.msra.mxu0 %v639
        %699 = vmatprep.subr.mxu0 %v643
        %700 = vmatpush1.msra.mxu0 %v642
        %701 = vmatprep.subr.mxu0 %v646
        %702 = vmatpush1.msra.mxu0 %v645
        %703 = vmatprep.subr.mxu0 %v649
        %704 = vmatpush1.msra.mxu0 %v648
        %705 = vmatprep.subr.mxu0 %v652
        %706 = vmatpush1.msra.mxu0 %v651
        %707 = vmatprep.subr.mxu0 %v655
        %708 = vmatpush1.msra.mxu0 %v654
        %709 = vmatprep.subr.mxu0 %v658
        %710 = vmatpush1.msra.mxu0 %v657
        %711 = vmatprep.subr.mxu0 %v661
        %712 = vmatpush1.msra.mxu0 %v660
        %713 = vmatprep.subr.mxu0 %v664
        %714 = vmatpush1.msra.mxu0 %v663
        %715 = vmatprep.subr.mxu0 0.0
        %716 = vmatpush1.msra.mxu0 0.0
        %717 = vmatprep.subr.mxu0 0.0
        %718 = vmatpush1.msra.mxu0 0.0
        %719 = vmatprep.subr.mxu0 0.0
        %720 = vmatpush1.msra.mxu0 0.0
        %721 = vmatprep.subr.mxu0 0.0
        %722 = vmatpush1.msra.mxu0 0.0
        %723 = vmatprep.subr.mxu0 0.0
        %724 = vmatpush1.msra.mxu0 0.0
        %725 = vmatprep.subr.mxu0 0.0
        %726 = vmatpush1.msra.mxu0 0.0
        %727 = vmatprep.subr.mxu0 0.0
        %728 = vmatpush1.msra.mxu0 0.0
        %729 = vmatprep.subr.mxu0 0.0
        %730 = vmatpush1.msra.mxu0 0.0
        %731 = vmatprep.subr.mxu0 0.0
        %732 = vmatpush1.msra.mxu0 0.0
        %733 = vmatprep.subr.mxu0 0.0
        %734 = vmatpush1.msra.mxu0 0.0
        %735 = vmatprep.subr.mxu0 0.0
        %736 = vmatpush1.msra.mxu0 0.0
        %737 = vmatprep.subr.mxu0 0.0
        %738 = vmatpush1.msra.mxu0 0.0
        %739 = vmatprep.subr.mxu0 0.0
        %740 = vmatpush1.msra.mxu0 0.0
        %741 = vmatprep.subr.mxu0 0.0
        %742 = vmatpush1.msra.mxu0 0.0
        %743 = vmatprep.subr.mxu0 0.0
        %744 = vmatpush1.msra.mxu0 0.0
        %745 = vmatprep.subr.mxu0 0.0
        %746 = vmatpush1.msra.mxu0 0.0
        %747 = vmatprep.mubr.f32.mxu0 0.0
        %748 = vmatmul.mubr.f32.gmra.mrb[0].mxu0 %v398
        %v749 = vpop.f32.mrb[0].mxu0
        %v750 = vadd.f32 %v671, %v749
        %v751 = vpop.f32.mrb[0].mxu0
        %v752 = vadd.f32 %v675, %v751
        %753 = vmatprep.mubr.f32.mxu0 0.0
        %754 = vmatmul.mubr.f32.gmra.mrb[0].mxu0 %v399
        %v755 = vpop.f32.mrb[0].mxu0
        %v756 = vadd.f32 %v671, %v755
        %v757 = vpop.f32.mrb[0].mxu0
        %v758 = vadd.f32 %v675, %v757
        %759 = vmatprep.mubr.f32.mxu0 0.0
        %760 = vmatmul.mubr.f32.gmra.mrb[0].mxu0 %v400
        %v761 = vpop.f32.mrb[0].mxu0
        %v762 = vadd.f32 %v671, %v761
        %v763 = vpop.f32.mrb[0].mxu0
        %v764 = vadd.f32 %v675, %v763
        %765 = vmatprep.mubr.f32.mxu0 0.0
        %766 = vmatmul.mubr.f32.gmra.mrb[0].mxu0 %v401
        %v767 = vpop.f32.mrb[0].mxu0
        %v768 = vadd.f32 %v671, %v767
        %v769 = vpop.f32.mrb[0].mxu0
        %v770 = vadd.f32 %v675, %v769
        %771 = vdwg.mxu0
        %772 = vmatprep.subr.mxu0 0.0
        %773 = vmatpush1.msra.mxu0 %v620
        %774 = vmatprep.subr.mxu0 0.0
        %775 = vmatpush1.msra.mxu0 %v623
        %776 = vmatprep.subr.mxu0 0.0
        %777 = vmatpush1.msra.mxu0 %v626
        %778 = vmatprep.subr.mxu0 0.0
        %779 = vmatpush1.msra.mxu0 %v629
        %780 = vmatprep.subr.mxu0 0.0
        %781 = vmatpush1.msra.mxu0 %v632
        %782 = vmatprep.subr.mxu0 0.0
        %783 = vmatpush1.msra.mxu0 %v635
        %784 = vmatprep.subr.mxu0 0.0
        %785 = vmatpush1.msra.mxu0 %v638
        %786 = vmatprep.subr.mxu0 0.0
        %787 = vmatpush1.msra.mxu0 %v641
        %788 = vmatprep.subr.mxu0 0.0
        %789 = vmatpush1.msra.mxu0 %v644
        %790 = vmatprep.subr.mxu0 0.0
        %791 = vmatpush1.msra.mxu0 %v647
        %792 = vmatprep.subr.mxu0 0.0
        %793 = vmatpush1.msra.mxu0 %v650
        %794 = vmatprep.subr.mxu0 0.0
        %795 = vmatpush1.msra.mxu0 %v653
        %796 = vmatprep.subr.mxu0 0.0
        %797 = vmatpush1.msra.mxu0 %v656
        %798 = vmatprep.subr.mxu0 0.0
        %799 = vmatpush1.msra.mxu0 %v659
        %800 = vmatprep.subr.mxu0 0.0
        %801 = vmatpush1.msra.mxu0 %v662
        %802 = vmatprep.subr.mxu0 0.0
        %803 = vmatpush1.msra.mxu0 %v665
        %804 = vmatprep.subr.mxu0 0.0
        %805 = vmatpush1.msra.mxu0 0.0
        %806 = vmatprep.subr.mxu0 0.0
        %807 = vmatpush1.msra.mxu0 0.0
        %808 = vmatprep.subr.mxu0 0.0
        %809 = vmatpush1.msra.mxu0 0.0
        %810 = vmatprep.subr.mxu0 0.0
        %811 = vmatpush1.msra.mxu0 0.0
        %812 = vmatprep.subr.mxu0 0.0
        %813 = vmatpush1.msra.mxu0 0.0
        %814 = vmatprep.subr.mxu0 0.0
        %815 = vmatpush1.msra.mxu0 0.0
        %816 = vmatprep.subr.mxu0 0.0
        %817 = vmatpush1.msra.mxu0 0.0
        %818 = vmatprep.subr.mxu0 0.0
        %819 = vmatpush1.msra.mxu0 0.0
        %820 = vmatprep.subr.mxu0 0.0
        %821 = vmatpush1.msra.mxu0 0.0
        %822 = vmatprep.subr.mxu0 0.0
        %823 = vmatpush1.msra.mxu0 0.0
        %824 = vmatprep.subr.mxu0 0.0
        %825 = vmatpush1.msra.mxu0 0.0
        %826 = vmatprep.subr.mxu0 0.0
        %827 = vmatpush1.msra.mxu0 0.0
        %828 = vmatprep.subr.mxu0 0.0
        %829 = vmatpush1.msra.mxu0 0.0
        %830 = vmatprep.subr.mxu0 0.0
        %831 = vmatpush1.msra.mxu0 0.0
        %832 = vmatprep.subr.mxu0 0.0
        %833 = vmatpush1.msra.mxu0 0.0
        %834 = vmatprep.subr.mxu0 0.0
        %835 = vmatpush1.msra.mxu0 0.0
        %836 = vmatprep.mubr.f32.mxu0 0.0
        %837 = vmatmul.mubr.f32.gmra.mrb[0].mxu0 %v398
        %v838 = vpop.f32.mrb[0].mxu0
        %v839 = vadd.f32 %v679, %v838
        %v840 = vpop.f32.mrb[0].mxu0
        %841 = vmatprep.mubr.f32.mxu0 0.0
        %842 = vmatmul.mubr.f32.gmra.mrb[0].mxu0 %v399
        %v843 = vpop.f32.mrb[0].mxu0
        %v844 = vadd.f32 %v679, %v843
        %v845 = vpop.f32.mrb[0].mxu0
        %846 = vmatprep.mubr.f32.mxu0 0.0
        %847 = vmatmul.mubr.f32.gmra.mrb[0].mxu0 %v400
        %v848 = vpop.f32.mrb[0].mxu0
        %v849 = vadd.f32 %v679, %v848
        %v850 = vpop.f32.mrb[0].mxu0
        %851 = vmatprep.mubr.f32.mxu0 0.0
        %852 = vmatmul.mubr.f32.gmra.mrb[0].mxu0 %v401
        %v853 = vpop.f32.mrb[0].mxu0
        %v854 = vadd.f32 %v679, %v853
        %v855 = vpop.f32.mrb[0].mxu0
        %856 = vdwg.mxu0
        %v857 = vadd.f32 %v511, %v750
        %v858 = vadd.f32 %v517, %v756
        %v859 = vadd.f32 %v523, %v762
        %v860 = vadd.f32 %v529, %v768
        %v861 = vxor.u32 %v857, 2147483648
        %v862 = vxor.u32 %v858, 2147483648
        %v863 = vxor.u32 %v859, 2147483648
        %v864 = vxor.u32 %v860, 2147483648
        %v865 = vmul.f32 %v861, 1.442695
        %v866 = vpow.pop %v865
        %v867 = vmul.f32 %v862, 1.442695
        %v868 = vpow.pop %v867
        %v869 = vmul.f32 %v863, 1.442695
        %v870 = vpow.pop %v869
        %v871 = vmul.f32 %v864, 1.442695
        %v872 = vpow.pop %v871
        %v873 = vadd.f32 %v866, 1.0
        %v874 = vadd.f32 %v868, 1.0
        %v875 = vadd.f32 %v870, 1.0
        %v876 = vadd.f32 %v872, 1.0
        %v877 = vrcp.pop %v873
        %v878 = vmul.f32 1.0, %v877
        %v879 = vrcp.pop %v874
        %v880 = vmul.f32 1.0, %v879
        %v881 = vrcp.pop %v875
        %v882 = vmul.f32 1.0, %v881
        %v883 = vrcp.pop %v876
        %v884 = vmul.f32 1.0, %v883
        %v885 = vadd.f32 %v513, %v752
        %v886 = vadd.f32 %v519, %v758
        %v887 = vadd.f32 %v525, %v764
        %v888 = vadd.f32 %v531, %v770
        %v889 = vxor.u32 %v885, 2147483648
        %v890 = vxor.u32 %v886, 2147483648
        %v891 = vxor.u32 %v887, 2147483648
        %v892 = vxor.u32 %v888, 2147483648
        %v893 = vmul.f32 %v889, 1.442695
        %v894 = vpow.pop %v893
        %v895 = vmul.f32 %v890, 1.442695
        %v896 = vpow.pop %v895
        %v897 = vmul.f32 %v891, 1.442695
        %v898 = vpow.pop %v897
        %v899 = vmul.f32 %v892, 1.442695
        %v900 = vpow.pop %v899
        %v901 = vadd.f32 %v894, 1.0
        %v902 = vadd.f32 %v896, 1.0
        %v903 = vadd.f32 %v898, 1.0
        %v904 = vadd.f32 %v900, 1.0
        %v905 = vrcp.pop %v901
        %v906 = vmul.f32 1.0, %v905
        %v907 = vrcp.pop %v902
        %v908 = vmul.f32 1.0, %v907
        %v909 = vrcp.pop %v903
        %v910 = vmul.f32 1.0, %v909
        %v911 = vrcp.pop %v904
        %v912 = vmul.f32 1.0, %v911
        %v913 = vmul.f32 %v878, %v839
        %v914 = vmul.f32 %v880, %v844
        %v915 = vmul.f32 %v882, %v849
        %v916 = vmul.f32 %v884, %v854
        %v917 = vadd.f32 %v600, %v913
        %v918 = vadd.f32 %v605, %v914
        %v919 = vadd.f32 %v610, %v915
        %v920 = vadd.f32 %v615, %v916
        %v921 = vtanh.pop %v917
        %v922 = vtanh.pop %v918
        %v923 = vtanh.pop %v919
        %v924 = vtanh.pop %v920
        %v925 = vsub.f32 1.0, %v906
        %v926 = vsub.f32 1.0, %v908
        %v927 = vsub.f32 1.0, %v910
        %v928 = vsub.f32 1.0, %v912
        %v929 = vmul.f32 %v925, %v921
        %v930 = vmul.f32 %v926, %v922
        %v931 = vmul.f32 %v927, %v923
        %v932 = vmul.f32 %v928, %v924
        %v933 = vmul.f32 %v906, %v398
        %v934 = vmul.f32 %v908, %v399
        %v935 = vmul.f32 %v910, %v400
        %v936 = vmul.f32 %v912, %v401
        %v937 = vadd.f32 %v929, %v933
        %v938 = vadd.f32 %v930, %v934
        %v939 = vadd.f32 %v931, %v935
        %v940 = vadd.f32 %v932, %v936
        %941 = vst [vmem:[#allocation2] sm:$0xff] %v937
        %942 = vst [vmem:[#allocation2 + $0x8] sm:$0xff] %v938
        %943 = vst [vmem:[#allocation2 + $0x10] sm:$0xff] %v939
        %944 = vst [vmem:[#allocation2 + $0x18] sm:$0xff] %v940
        %v945 = vld [vmem:[#allocation11] sm:$0xff]
        %v946 = vld [vmem:[#allocation11 + $0x8] sm:$0xff]
        %v947 = vld [vmem:[#allocation11 + $0x10] sm:$0xff]
        %v948 = vld [vmem:[#allocation11 + $0x18] sm:$0xff]
        %v949 = vld [vmem:[#allocation11 + $0x20] sm:$0xff]
        %v950 = vld [vmem:[#allocation11 + $0x28] sm:$0xff]
        %v951 = vld [vmem:[#allocation11 + $0x30] sm:$0xff]
        %v952 = vld [vmem:[#allocation11 + $0x38] sm:$0xff]
        %v953 = vld [vmem:[#allocation11 + $0x40] sm:$0xff]
        %v954 = vld [vmem:[#allocation11 + $0x48] sm:$0xff]
        %v955 = vld [vmem:[#allocation11 + $0x50] sm:$0xff]
        %v956 = vld [vmem:[#allocation11 + $0x58] sm:$0xff]
        %v957 = vld [vmem:[#allocation11 + $0x60] sm:$0xff]
        %v958 = vld [vmem:[#allocation11 + $0x68] sm:$0xff]
        %v959 = vld [vmem:[#allocation11 + $0x70] sm:$0xff]
        %v960 = vld [vmem:[#allocation11 + $0x78] sm:$0xff]
        %v961 = vld [vmem:[#allocation11 + $0x80] sm:$0xff]
        %v962 = vld [vmem:[#allocation11 + $0x88] sm:$0xff]
        %v963 = vld [vmem:[#allocation11 + $0x90] sm:$0xff]
        %v964 = vld [vmem:[#allocation11 + $0x98] sm:$0xff]
        %v965 = vld [vmem:[#allocation11 + $0xa0] sm:$0xff]
        %v966 = vld [vmem:[#allocation11 + $0xa8] sm:$0xff]
        %v967 = vld [vmem:[#allocation11 + $0xb0] sm:$0xff]
        %v968 = vld [vmem:[#allocation11 + $0xb8] sm:$0xff]
        %v969 = vld [vmem:[#allocation11 + $0xc0] sm:$0xff]
        %v970 = vld [vmem:[#allocation11 + $0xc8] sm:$0xff]
        %v971 = vld [vmem:[#allocation11 + $0xd0] sm:$0xff]
        %v972 = vld [vmem:[#allocation11 + $0xd8] sm:$0xff]
        %v973 = vld [vmem:[#allocation11 + $0xe0] sm:$0xff]
        %v974 = vld [vmem:[#allocation11 + $0xe8] sm:$0xff]
        %v975 = vld [vmem:[#allocation11 + $0xf0] sm:$0xff]
        %v976 = vld [vmem:[#allocation11 + $0xf8] sm:$0xff]
        %v977 = vld [vmem:[%s7] sm:$0x3]
        %v979 = vlaneseq
        %v980 = vshrl.u32 %v979, 7
        %v981 = vsub.s32 0, %v980
        %v982 = vrot.slane %v977, %v981
        %v983 = vlaneseq
        %v984 = vshrl.u32 %v983, 7
        %v985 = vsub.s32 1, %v984
        %v986 = vrot.slane %v977, %v985
        %989 = vmatprep.subr.mxu0 %v946
        %990 = vmatpush1.msra.mxu0 %v945
        %991 = vmatprep.subr.mxu0 %v948
        %992 = vmatpush1.msra.mxu0 %v947
        %993 = vmatprep.subr.mxu0 %v950
        %994 = vmatpush1.msra.mxu0 %v949
        %995 = vmatprep.subr.mxu0 %v952
        %996 = vmatpush1.msra.mxu0 %v951
        %997 = vmatprep.subr.mxu0 %v954
        %998 = vmatpush1.msra.mxu0 %v953
        %999 = vmatprep.subr.mxu0 %v956
        %1000 = vmatpush1.msra.mxu0 %v955
        %1001 = vmatprep.subr.mxu0 %v958
        %1002 = vmatpush1.msra.mxu0 %v957
        %1003 = vmatprep.subr.mxu0 %v960
        %1004 = vmatpush1.msra.mxu0 %v959
        %1005 = vmatprep.subr.mxu0 %v962
        %1006 = vmatpush1.msra.mxu0 %v961
        %1007 = vmatprep.subr.mxu0 %v964
        %1008 = vmatpush1.msra.mxu0 %v963
        %1009 = vmatprep.subr.mxu0 %v966
        %1010 = vmatpush1.msra.mxu0 %v965
        %1011 = vmatprep.subr.mxu0 %v968
        %1012 = vmatpush1.msra.mxu0 %v967
        %1013 = vmatprep.subr.mxu0 %v970
        %1014 = vmatpush1.msra.mxu0 %v969
        %1015 = vmatprep.subr.mxu0 %v972
        %1016 = vmatpush1.msra.mxu0 %v971
        %1017 = vmatprep.subr.mxu0 %v974
        %1018 = vmatpush1.msra.mxu0 %v973
        %1019 = vmatprep.subr.mxu0 %v976
        %1020 = vmatpush1.msra.mxu0 %v975
        %1021 = vmatprep.subr.mxu0 0.0
        %1022 = vmatpush1.msra.mxu0 0.0
        %1023 = vmatprep.subr.mxu0 0.0
        %1024 = vmatpush1.msra.mxu0 0.0
        %1025 = vmatprep.subr.mxu0 0.0
        %1026 = vmatpush1.msra.mxu0 0.0
        %1027 = vmatprep.subr.mxu0 0.0
        %1028 = vmatpush1.msra.mxu0 0.0
        %1029 = vmatprep.subr.mxu0 0.0
        %1030 = vmatpush1.msra.mxu0 0.0
        %1031 = vmatprep.subr.mxu0 0.0
        %1032 = vmatpush1.msra.mxu0 0.0
        %1033 = vmatprep.subr.mxu0 0.0
        %1034 = vmatpush1.msra.mxu0 0.0
        %1035 = vmatprep.subr.mxu0 0.0
        %1036 = vmatpush1.msra.mxu0 0.0
        %1037 = vmatprep.subr.mxu0 0.0
        %1038 = vmatpush1.msra.mxu0 0.0
        %1039 = vmatprep.subr.mxu0 0.0
        %1040 = vmatpush1.msra.mxu0 0.0
        %1041 = vmatprep.subr.mxu0 0.0
        %1042 = vmatpush1.msra.mxu0 0.0
        %1043 = vmatprep.subr.mxu0 0.0
        %1044 = vmatpush1.msra.mxu0 0.0
        %1045 = vmatprep.subr.mxu0 0.0
        %1046 = vmatpush1.msra.mxu0 0.0
        %1047 = vmatprep.subr.mxu0 0.0
        %1048 = vmatpush1.msra.mxu0 0.0
        %1049 = vmatprep.subr.mxu0 0.0
        %1050 = vmatpush1.msra.mxu0 0.0
        %1051 = vmatprep.subr.mxu0 0.0
        %1052 = vmatpush1.msra.mxu0 0.0
        %1053 = vmatprep.mubr.f32.mxu0 0.0
        %1054 = vmatmul.mubr.f32.gmra.mrb[0].mxu0 %v937
        %v1055 = vpop.f32.mrb[0].mxu0
        %v1056 = vadd.f32 %v982, %v1055
        %v1057 = vpop.f32.mrb[0].mxu0
        %v1058 = vadd.f32 %v986, %v1057
        %1059 = vmatprep.mubr.f32.mxu0 0.0
        %1060 = vmatmul.mubr.f32.gmra.mrb[0].mxu0 %v938
        %v1061 = vpop.f32.mrb[0].mxu0
        %v1062 = vadd.f32 %v982, %v1061
        %v1063 = vpop.f32.mrb[0].mxu0
        %v1064 = vadd.f32 %v986, %v1063
        %1065 = vmatprep.mubr.f32.mxu0 0.0
        %1066 = vmatmul.mubr.f32.gmra.mrb[0].mxu0 %v939
        %v1067 = vpop.f32.mrb[0].mxu0
        %v1068 = vadd.f32 %v982, %v1067
        %v1069 = vpop.f32.mrb[0].mxu0
        %v1070 = vadd.f32 %v986, %v1069
        %1071 = vmatprep.mubr.f32.mxu0 0.0
        %1072 = vmatmul.mubr.f32.gmra.mrb[0].mxu0 %v940
        %v1073 = vpop.f32.mrb[0].mxu0
        %v1074 = vadd.f32 %v982, %v1073
        %v1075 = vpop.f32.mrb[0].mxu0
        %v1076 = vadd.f32 %v986, %v1075
        %1077 = vdwg.mxu0
        %v1078 = vtanh.pop %v1056
        %v1079 = vtanh.pop %v1058
        %v1080 = vtanh.pop %v1062
        %v1081 = vtanh.pop %v1064
        %v1082 = vtanh.pop %v1068
        %v1083 = vtanh.pop %v1070
        %v1084 = vtanh.pop %v1074
        %v1085 = vtanh.pop %v1076
        %1086 = vmatprep.subr.mxu0 0.0
        %1087 = vmatpush1.xpose.msra.mxu0 %v1079
        %1088 = vmatprep.subr.mxu0 0.0
        %1089 = vmatpush1.xpose.msra.mxu0 %v1081
        %1090 = vmatprep.subr.mxu0 0.0
        %1091 = vmatpush1.xpose.msra.mxu0 0.0
        %1092 = vmatprep.subr.mxu0 0.0
        %1093 = vmatpush1.xpose.msra.mxu0 0.0
        %1094 = vmatprep.subr.mxu0 0.0
        %1095 = vmatpush1.xpose.msra.mxu0 0.0
        %1096 = vmatprep.subr.mxu0 0.0
        %1097 = vmatpush1.xpose.msra.mxu0 0.0
        %1098 = vmatprep.subr.mxu0 0.0
        %1099 = vmatpush1.xpose.msra.mxu0 0.0
        %1100 = vmatprep.subr.mxu0 0.0
        %1101 = vmatpush1.xpose.msra.mxu0 0.0
        %1102 = vmatprep.subr.mxu0 0.0
        %1103 = vmatpush1.xpose.msra.mxu0 0.0
        %1104 = vmatprep.subr.mxu0 0.0
        %1105 = vmatpush1.xpose.msra.mxu0 0.0
        %1106 = vmatprep.subr.mxu0 0.0
        %1107 = vmatpush1.xpose.msra.mxu0 0.0
        %1108 = vmatprep.subr.mxu0 0.0
        %1109 = vmatpush1.xpose.msra.mxu0 0.0
        %1110 = vmatprep.subr.mxu0 0.0
        %1111 = vmatpush1.xpose.msra.mxu0 0.0
        %1112 = vmatprep.subr.mxu0 0.0
        %1113 = vmatpush1.xpose.msra.mxu0 0.0
        %1114 = vmatprep.subr.mxu0 0.0
        %1115 = vmatpush1.xpose.msra.mxu0 0.0
        %1116 = vmatprep.subr.mxu0 0.0
        %1117 = vmatpush1.xpose.msra.mxu0 0.0
        %1118 = vmatprep.subr.mxu0 0.0
        %1119 = vmatpush1.xpose.msra.mxu0 0.0
        %1120 = vmatprep.subr.mxu0 0.0
        %1121 = vmatpush1.xpose.msra.mxu0 0.0
        %1122 = vmatprep.subr.mxu0 0.0
        %1123 = vmatpush1.xpose.msra.mxu0 0.0
        %1124 = vmatprep.subr.mxu0 0.0
        %1125 = vmatpush1.xpose.msra.mxu0 0.0
        %1126 = vmatprep.subr.mxu0 0.0
        %1127 = vmatpush1.xpose.msra.mxu0 0.0
        %1128 = vmatprep.subr.mxu0 0.0
        %1129 = vmatpush1.xpose.msra.mxu0 0.0
        %1130 = vmatprep.subr.mxu0 0.0
        %1131 = vmatpush1.xpose.msra.mxu0 0.0
        %1132 = vmatprep.subr.mxu0 0.0
        %1133 = vmatpush1.xpose.msra.mxu0 0.0
        %1134 = vmatprep.subr.mxu0 0.0
        %1135 = vmatpush1.xpose.msra.mxu0 0.0
        %1136 = vmatprep.subr.mxu0 0.0
        %1137 = vmatpush1.xpose.msra.mxu0 0.0
        %1138 = vmatprep.subr.mxu0 0.0
        %1139 = vmatpush1.xpose.msra.mxu0 0.0
        %1140 = vmatprep.subr.mxu0 0.0
        %1141 = vmatpush1.xpose.msra.mxu0 0.0
        %1142 = vmatprep.subr.mxu0 0.0
        %1143 = vmatpush1.xpose.msra.mxu0 0.0
        %1144 = vmatprep.subr.mxu0 0.0
        %1145 = vmatpush1.xpose.msra.mxu0 0.0
        %1146 = vmatprep.subr.mxu0 0.0
        %1147 = vmatpush1.xpose.msra.mxu0 0.0
        %1148 = vmatprep.subr.mxu0 0.0
        %1149 = vmatpush1.xpose.msra.mxu0 0.0
        %1150 = vmatprep.mubr.f32.mxu0 0.0
        %1151 = vmatmul.mubr.f32.gmra.mrb[0].mxu0 %v1078
        %v1152 = vpop.f32.mrb[0].mxu0
        %v1153 = vadd.f32 0.0, %v1152
        %v1154 = vpop.f32.mrb[0].mxu0
        %1155 = vmatprep.mubr.f32.mxu0 0.0
        %1156 = vmatmul.mubr.f32.gmra.mrb[0].mxu0 %v1080
        %v1157 = vpop.f32.mrb[0].mxu0
        %v1158 = vadd.f32 0.0, %v1157
        %v1159 = vpop.f32.mrb[0].mxu0
        %1160 = vdwg.mxu0
        %1161 = vmatprep.subr.mxu0 0.0
        %1162 = vmatpush1.xpose.msra.mxu0 %v1083
        %1163 = vmatprep.subr.mxu0 0.0
        %1164 = vmatpush1.xpose.msra.mxu0 %v1085
        %1165 = vmatprep.subr.mxu0 0.0
        %1166 = vmatpush1.xpose.msra.mxu0 0.0
        %1167 = vmatprep.subr.mxu0 0.0
        %1168 = vmatpush1.xpose.msra.mxu0 0.0
        %1169 = vmatprep.subr.mxu0 0.0
        %1170 = vmatpush1.xpose.msra.mxu0 0.0
        %1171 = vmatprep.subr.mxu0 0.0
        %1172 = vmatpush1.xpose.msra.mxu0 0.0
        %1173 = vmatprep.subr.mxu0 0.0
        %1174 = vmatpush1.xpose.msra.mxu0 0.0
        %1175 = vmatprep.subr.mxu0 0.0
        %1176 = vmatpush1.xpose.msra.mxu0 0.0
        %1177 = vmatprep.subr.mxu0 0.0
        %1178 = vmatpush1.xpose.msra.mxu0 0.0
        %1179 = vmatprep.subr.mxu0 0.0
        %1180 = vmatpush1.xpose.msra.mxu0 0.0
        %1181 = vmatprep.subr.mxu0 0.0
        %1182 = vmatpush1.xpose.msra.mxu0 0.0
        %1183 = vmatprep.subr.mxu0 0.0
        %1184 = vmatpush1.xpose.msra.mxu0 0.0
        %1185 = vmatprep.subr.mxu0 0.0
        %1186 = vmatpush1.xpose.msra.mxu0 0.0
        %1187 = vmatprep.subr.mxu0 0.0
        %1188 = vmatpush1.xpose.msra.mxu0 0.0
        %1189 = vmatprep.subr.mxu0 0.0
        %1190 = vmatpush1.xpose.msra.mxu0 0.0
        %1191 = vmatprep.subr.mxu0 0.0
        %1192 = vmatpush1.xpose.msra.mxu0 0.0
        %1193 = vmatprep.subr.mxu0 0.0
        %1194 = vmatpush1.xpose.msra.mxu0 0.0
        %1195 = vmatprep.subr.mxu0 0.0
        %1196 = vmatpush1.xpose.msra.mxu0 0.0
        %1197 = vmatprep.subr.mxu0 0.0
        %1198 = vmatpush1.xpose.msra.mxu0 0.0
        %1199 = vmatprep.subr.mxu0 0.0
        %1200 = vmatpush1.xpose.msra.mxu0 0.0
        %1201 = vmatprep.subr.mxu0 0.0
        %1202 = vmatpush1.xpose.msra.mxu0 0.0
        %1203 = vmatprep.subr.mxu0 0.0
        %1204 = vmatpush1.xpose.msra.mxu0 0.0
        %1205 = vmatprep.subr.mxu0 0.0
        %1206 = vmatpush1.xpose.msra.mxu0 0.0
        %1207 = vmatprep.subr.mxu0 0.0
        %1208 = vmatpush1.xpose.msra.mxu0 0.0
        %1209 = vmatprep.subr.mxu0 0.0
        %1210 = vmatpush1.xpose.msra.mxu0 0.0
        %1211 = vmatprep.subr.mxu0 0.0
        %1212 = vmatpush1.xpose.msra.mxu0 0.0
        %1213 = vmatprep.subr.mxu0 0.0
        %1214 = vmatpush1.xpose.msra.mxu0 0.0
        %1215 = vmatprep.subr.mxu0 0.0
        %1216 = vmatpush1.xpose.msra.mxu0 0.0
        %1217 = vmatprep.subr.mxu0 0.0
        %1218 = vmatpush1.xpose.msra.mxu0 0.0
        %1219 = vmatprep.subr.mxu0 0.0
        %1220 = vmatpush1.xpose.msra.mxu0 0.0
        %1221 = vmatprep.subr.mxu0 0.0
        %1222 = vmatpush1.xpose.msra.mxu0 0.0
        %1223 = vmatprep.subr.mxu0 0.0
        %1224 = vmatpush1.xpose.msra.mxu0 0.0
        %1225 = vmatprep.mubr.f32.mxu0 0.0
        %1226 = vmatmul.mubr.f32.gmra.mrb[0].mxu0 %v1082
        %v1227 = vpop.f32.mrb[0].mxu0
        %v1228 = vadd.f32 0.0, %v1227
        %v1229 = vpop.f32.mrb[0].mxu0
        %1230 = vmatprep.mubr.f32.mxu0 0.0
        %1231 = vmatmul.mubr.f32.gmra.mrb[0].mxu0 %v1084
        %v1232 = vpop.f32.mrb[0].mxu0
        %v1233 = vadd.f32 0.0, %v1232
        %v1234 = vpop.f32.mrb[0].mxu0
        %1235 = vdwg.mxu0
        %1236 = vmatprep.subr.mxu0 0.0
        %1237 = vmatpush1.xpose.msra.mxu0 %v1078
        %1238 = vmatprep.subr.mxu0 0.0
        %1239 = vmatpush1.xpose.msra.mxu0 %v1080
        %1240 = vmatprep.subr.mxu0 0.0
        %1241 = vmatpush1.xpose.msra.mxu0 0.0
        %1242 = vmatprep.subr.mxu0 0.0
        %1243 = vmatpush1.xpose.msra.mxu0 0.0
        %1244 = vmatprep.subr.mxu0 0.0
        %1245 = vmatpush1.xpose.msra.mxu0 0.0
        %1246 = vmatprep.subr.mxu0 0.0
        %1247 = vmatpush1.xpose.msra.mxu0 0.0
        %1248 = vmatprep.subr.mxu0 0.0
        %1249 = vmatpush1.xpose.msra.mxu0 0.0
        %1250 = vmatprep.subr.mxu0 0.0
        %1251 = vmatpush1.xpose.msra.mxu0 0.0
        %1252 = vmatprep.subr.mxu0 0.0
        %1253 = vmatpush1.xpose.msra.mxu0 0.0
        %1254 = vmatprep.subr.mxu0 0.0
        %1255 = vmatpush1.xpose.msra.mxu0 0.0
        %1256 = vmatprep.subr.mxu0 0.0
        %1257 = vmatpush1.xpose.msra.mxu0 0.0
        %1258 = vmatprep.subr.mxu0 0.0
        %1259 = vmatpush1.xpose.msra.mxu0 0.0
        %1260 = vmatprep.subr.mxu0 0.0
        %1261 = vmatpush1.xpose.msra.mxu0 0.0
        %1262 = vmatprep.subr.mxu0 0.0
        %1263 = vmatpush1.xpose.msra.mxu0 0.0
        %1264 = vmatprep.subr.mxu0 0.0
        %1265 = vmatpush1.xpose.msra.mxu0 0.0
        %1266 = vmatprep.subr.mxu0 0.0
        %1267 = vmatpush1.xpose.msra.mxu0 0.0
        %1268 = vmatprep.subr.mxu0 0.0
        %1269 = vmatpush1.xpose.msra.mxu0 0.0
        %1270 = vmatprep.subr.mxu0 0.0
        %1271 = vmatpush1.xpose.msra.mxu0 0.0
        %1272 = vmatprep.subr.mxu0 0.0
        %1273 = vmatpush1.xpose.msra.mxu0 0.0
        %1274 = vmatprep.subr.mxu0 0.0
        %1275 = vmatpush1.xpose.msra.mxu0 0.0
        %1276 = vmatprep.subr.mxu0 0.0
        %1277 = vmatpush1.xpose.msra.mxu0 0.0
        %1278 = vmatprep.subr.mxu0 0.0
        %1279 = vmatpush1.xpose.msra.mxu0 0.0
        %1280 = vmatprep.subr.mxu0 0.0
        %1281 = vmatpush1.xpose.msra.mxu0 0.0
        %1282 = vmatprep.subr.mxu0 0.0
        %1283 = vmatpush1.xpose.msra.mxu0 0.0
        %1284 = vmatprep.subr.mxu0 0.0
        %1285 = vmatpush1.xpose.msra.mxu0 0.0
        %1286 = vmatprep.subr.mxu0 0.0
        %1287 = vmatpush1.xpose.msra.mxu0 0.0
        %1288 = vmatprep.subr.mxu0 0.0
        %1289 = vmatpush1.xpose.msra.mxu0 0.0
        %1290 = vmatprep.subr.mxu0 0.0
        %1291 = vmatpush1.xpose.msra.mxu0 0.0
        %1292 = vmatprep.subr.mxu0 0.0
        %1293 = vmatpush1.xpose.msra.mxu0 0.0
        %1294 = vmatprep.subr.mxu0 0.0
        %1295 = vmatpush1.xpose.msra.mxu0 0.0
        %1296 = vmatprep.subr.mxu0 0.0
        %1297 = vmatpush1.xpose.msra.mxu0 0.0
        %1298 = vmatprep.subr.mxu0 0.0
        %1299 = vmatpush1.xpose.msra.mxu0 0.0
        %1300 = vmatprep.mubr.f32.mxu0 0.0
        %1301 = vmatmul.mubr.f32.gmra.mrb[0].mxu0 %v1079
        %v1302 = vpop.f32.mrb[0].mxu0
        %v1303 = vadd.f32 0.0, %v1302
        %v1304 = vpop.f32.mrb[0].mxu0
        %1305 = vmatprep.mubr.f32.mxu0 0.0
        %1306 = vmatmul.mubr.f32.gmra.mrb[0].mxu0 %v1081
        %v1307 = vpop.f32.mrb[0].mxu0
        %v1308 = vadd.f32 0.0, %v1307
        %v1309 = vpop.f32.mrb[0].mxu0
        %1310 = vdwg.mxu0
        %1311 = vmatprep.subr.mxu0 0.0
        %1312 = vmatpush1.xpose.msra.mxu0 %v1082
        %1313 = vmatprep.subr.mxu0 0.0
        %1314 = vmatpush1.xpose.msra.mxu0 %v1084
        %1315 = vmatprep.subr.mxu0 0.0
        %1316 = vmatpush1.xpose.msra.mxu0 0.0
        %1317 = vmatprep.subr.mxu0 0.0
        %1318 = vmatpush1.xpose.msra.mxu0 0.0
        %1319 = vmatprep.subr.mxu0 0.0
        %1320 = vmatpush1.xpose.msra.mxu0 0.0
        %1321 = vmatprep.subr.mxu0 0.0
        %1322 = vmatpush1.xpose.msra.mxu0 0.0
        %1323 = vmatprep.subr.mxu0 0.0
        %1324 = vmatpush1.xpose.msra.mxu0 0.0
        %1325 = vmatprep.subr.mxu0 0.0
        %1326 = vmatpush1.xpose.msra.mxu0 0.0
        %1327 = vmatprep.subr.mxu0 0.0
        %1328 = vmatpush1.xpose.msra.mxu0 0.0
        %1329 = vmatprep.subr.mxu0 0.0
        %1330 = vmatpush1.xpose.msra.mxu0 0.0
        %1331 = vmatprep.subr.mxu0 0.0
        %1332 = vmatpush1.xpose.msra.mxu0 0.0
        %1333 = vmatprep.subr.mxu0 0.0
        %1334 = vmatpush1.xpose.msra.mxu0 0.0
        %1335 = vmatprep.subr.mxu0 0.0
        %1336 = vmatpush1.xpose.msra.mxu0 0.0
        %1337 = vmatprep.subr.mxu0 0.0
        %1338 = vmatpush1.xpose.msra.mxu0 0.0
        %1339 = vmatprep.subr.mxu0 0.0
        %1340 = vmatpush1.xpose.msra.mxu0 0.0
        %1341 = vmatprep.subr.mxu0 0.0
        %1342 = vmatpush1.xpose.msra.mxu0 0.0
        %1343 = vmatprep.subr.mxu0 0.0
        %1344 = vmatpush1.xpose.msra.mxu0 0.0
        %1345 = vmatprep.subr.mxu0 0.0
        %1346 = vmatpush1.xpose.msra.mxu0 0.0
        %1347 = vmatprep.subr.mxu0 0.0
        %1348 = vmatpush1.xpose.msra.mxu0 0.0
        %1349 = vmatprep.subr.mxu0 0.0
        %1350 = vmatpush1.xpose.msra.mxu0 0.0
        %1351 = vmatprep.subr.mxu0 0.0
        %1352 = vmatpush1.xpose.msra.mxu0 0.0
        %1353 = vmatprep.subr.mxu0 0.0
        %1354 = vmatpush1.xpose.msra.mxu0 0.0
        %1355 = vmatprep.subr.mxu0 0.0
        %1356 = vmatpush1.xpose.msra.mxu0 0.0
        %1357 = vmatprep.subr.mxu0 0.0
        %1358 = vmatpush1.xpose.msra.mxu0 0.0
        %1359 = vmatprep.subr.mxu0 0.0
        %1360 = vmatpush1.xpose.msra.mxu0 0.0
        %1361 = vmatprep.subr.mxu0 0.0
        %1362 = vmatpush1.xpose.msra.mxu0 0.0
        %1363 = vmatprep.subr.mxu0 0.0
        %1364 = vmatpush1.xpose.msra.mxu0 0.0
        %1365 = vmatprep.subr.mxu0 0.0
        %1366 = vmatpush1.xpose.msra.mxu0 0.0
        %1367 = vmatprep.subr.mxu0 0.0
        %1368 = vmatpush1.xpose.msra.mxu0 0.0
        %1369 = vmatprep.subr.mxu0 0.0
        %1370 = vmatpush1.xpose.msra.mxu0 0.0
        %1371 = vmatprep.subr.mxu0 0.0
        %1372 = vmatpush1.xpose.msra.mxu0 0.0
        %1373 = vmatprep.subr.mxu0 0.0
        %1374 = vmatpush1.xpose.msra.mxu0 0.0
        %1375 = vmatprep.mubr.f32.mxu0 0.0
        %1376 = vmatmul.mubr.f32.gmra.mrb[0].mxu0 %v1083
        %v1377 = vpop.f32.mrb[0].mxu0
        %v1378 = vadd.f32 0.0, %v1377
        %v1379 = vpop.f32.mrb[0].mxu0
        %1380 = vmatprep.mubr.f32.mxu0 0.0
        %1381 = vmatmul.mubr.f32.gmra.mrb[0].mxu0 %v1085
        %v1382 = vpop.f32.mrb[0].mxu0
        %v1383 = vadd.f32 0.0, %v1382
        %v1384 = vpop.f32.mrb[0].mxu0
        %1385 = vdwg.mxu0
        %v1386 = vsub.f32 %v1153, %v1303
        %v1387 = vsub.f32 %v1158, %v1308
        %v1388 = vsub.f32 %v1228, %v1378
        %v1389 = vsub.f32 %v1233, %v1383
        %v1390 = vtanh.pop %v1386
        %v1391 = vtanh.pop %v1387
        %v1392 = vtanh.pop %v1388
        %v1393 = vtanh.pop %v1389
        %v1394 = vmax.f32 %v1390, 0.0
        %v1395 = vmax.f32 %v1391, 0.0
        %v1396 = vmax.f32 %v1392, 0.0
        %v1397 = vmax.f32 %v1393, 0.0
        %v1398 = vlaneseq
        %v1399 = vshrl.u32 %v1398, 7
        %v1400 = vadd.s32 %v1399, 8
        %v1401 = vlaneseq
        %v1402 = vand.u32 %v1401, 127
        %vm1403 = vcmp.eq.s32.totalorder %v1399, %v1402
        %vm1404 = vcmp.eq.s32.totalorder %v1400, %v1402
        %v1405 = vsel %vm1403, 1.0, 0.0
        %v1406 = vsel %vm1404, 1.0, 0.0
        %v1407 = vadd.f32 %v1394, %v1405
        %v1408 = vadd.f32 %v1395, %v1406
        %v1409 = vadd.f32 %v1396, %v1405
        %v1410 = vadd.f32 %v1397, %v1406
        %vm1411 = vcmask 130048
        %v1412 = vsel %vm1411, %v1407, 0.0
        %1413 = vadd.xlane.f32.xlu0 %v1412
        %v1414 = vpop.xlane.xlu0 %1413
        %v1415 = vsel %vm1411, %v1408, 0.0
        %1416 = vadd.xlane.f32.xlu0 %v1415
        %v1417 = vpop.xlane.xlu0 %1416
        %v1418 = vsel %vm1411, %v1409, 0.0
        %1419 = vadd.xlane.f32.xlu0 %v1418
        %v1420 = vpop.xlane.xlu0 %1419
        %v1421 = vsel %vm1411, %v1410, 0.0
        %1422 = vadd.xlane.f32.xlu0 %v1421
        %v1423 = vpop.xlane.xlu0 %1422
        %v1424 = vrcp.pop %v1414
        %v1425 = vrcp.pop %v1417
        %v1426 = vrcp.pop %v1420
        %v1427 = vrcp.pop %v1423
        %v1428 = vmul.f32 %v1407, %v1424
        %v1429 = vmul.f32 %v1408, %v1425
        %v1430 = vmul.f32 %v1409, %v1426
        %v1431 = vmul.f32 %v1410, %v1427
        %v1432 = vpack.c.bf16 %v1429, %v1428
        %v1433 = vpack.c.bf16 %v1431, %v1430
        %v1436 = vunpack.c.l.b16 %v1432
        %v1437 = vunpack.c.h.b16 %v1432
        %v1438 = vunpack.c.l.b16 %v1433
        %v1439 = vunpack.c.h.b16 %v1433
        %v1440 = vpack.c.b16 %v1436, %v1436
        %v1441 = vpack.c.b16 %v1437, %v1437
        %v1442 = vpack.c.b16 %v1438, %v1438
        %v1443 = vpack.c.b16 %v1439, %v1439
        %vm1448 = vcmask 125952
        %1449 = vst.msk [vmem:[%s381] sm:$0xf] %vm1448, %v1440
        %1450 = vst.msk [vmem:[%s381 + $0x4] sm:$0xf] %vm1448, %v1441
        %1451 = vst.msk [vmem:[%s381 + $0x8] sm:$0xf] %vm1448, %v1442
        %1452 = vst.msk [vmem:[%s381 + $0xc] sm:$0xf] %vm1448, %v1443
        %s1453 = sand.u32 %s208, 1
        %s1454 = scalar_lea.sflag [#allocation5], %s1453
        %s1455 = sand.u32 %s208, 1
        %s1456 = smul.addr %s1455, 16
        %s1457 = scalar_lea.vmem [#allocation12], %s1456
        // Predicated region
        $region77: #{tpu_custom_call.1} parent=51 // pred_check
          %p1458 = pneg %p218
        $region78: #{tpu_custom_call.1} parent=51 // pred_check_branch
          %1460 = sbr.rel (%p1458) target = $region80
        $region79: #{tpu_custom_call.1} parent=51 // pred_region
          %s1462 = ssub.s32 256, 256
          %1463 = vsyncadd %s1454, %s1462
          %s1464 = smul.addr %s27, 4
          %s1465 = smul.addr %s1464, 64
          %s1466 = scalar_lea.hbm %s8, %s1465
          %s1467 = sshll.u32 %s1457, 4
          %s1468 = int_to_ptr.vmem [resolvable:$true] %s1467
          %1473 = dma.vmem_to_hbm [thread:$0]  %s1468, 256, %s1466, %s1454, 64, 64, 4
        $region80: #{tpu_custom_call.1} parent=51 // pred_fallthru
          _
      $region52: #{tpu_custom_call.1} parent=5 // pred_fallthru
        _
      %p1474 = scmp.le.s32.totalorder 2, %s22
      // Predicated region
      $region81: #{tpu_custom_call.1} parent=5 // pred_check
        %p1475 = pneg %p1474
      $region82: #{tpu_custom_call.1} parent=5 // pred_check_branch
        %1477 = sbr.rel (%p1475) target = $region84
      $region83: #{tpu_custom_call.1} parent=5 // pred_region
        %s1478 = ssub.s32 %s22, 2
        // Predicated region
        $region85: #{tpu_custom_call.1} parent=83 // pred_check
          %p1479 = pneg %p224
        $region86: #{tpu_custom_call.1} parent=83 // pred_check_branch
          %1481 = sbr.rel (%p1479) target = $region88
        $region87: #{tpu_custom_call.1} parent=83 // pred_region
          %s1482 = sand.u32 %s209, 1
          %s1483 = scalar_lea.sflag [#allocation5], %s1482
          %s1484 = sand.u32 %s209, 1
          %s1485 = smul.addr %s1484, 16
          %s1486 = scalar_lea.vmem [#allocation12], %s1485
          %1487 = dma.done %s1483, 256
        $region88: #{tpu_custom_call.1} parent=83 // pred_fallthru
          _
      $region84: #{tpu_custom_call.1} parent=5 // pred_fallthru
        _
    $region6: #{tpu_custom_call.1} parent=1 // loop_footer
      %s26 = sadd.s32 1, %s22
    $region7: #{tpu_custom_call.1} parent=1 // loop_footer_branch
      %21 = sbr.rel target = $region3
    $region8: #{tpu_custom_call.1} parent=1 // loop_exit
      _
    %1488 = vsyncpa [#allocation4], 1
    %s1489 = scalar_lea.sflag [#allocation4], 1
    %1490 = vsyncpa %s1489, 1
    %1491 = vsyncpa [#allocation7], 1
    %1492 = vsyncpa [#allocation10], 1
    %1493 = vsyncpa [#allocation5], 1
    %s1494 = scalar_lea.sflag [#allocation5], 1
    %1495 = vsyncpa %s1494, 1

</llo_original>
